<compile_context>
chip_gen: v7x
topology: tpu7x:2x2x1
jax: 0.10.0
libtpu: 0.0.40
codegen_flags: <defaults>
</compile_context>

<pallas_src>
import numpy as np
import jax
import jax.numpy as jnp
from jax.experimental import pallas as pl
from jax.experimental.pallas import tpu as pltpu


def _conv3x3_folded(pad_ref, w_ref, b_ref, rows, wp, c2):
    """3x3 conv (pad=1) over a W-parity-folded, zero-haloed scratch buffer.

    pad_ref: [rows+2, wp+1, c2] f32, w_ref: [6*c2, n_out] bf16, b_ref: [1, n_out] f32.
    Returns [rows*wp, n_out] f32 (bias added, no activation).
    """
    m = rows * wp
    n_out = w_ref.shape[1]
    bf16 = jnp.bfloat16
    if c2 >= 128:
        # Per-tap accumulation: never materializes the [M, 6*c2] im2col patch.
        acc = jnp.broadcast_to(b_ref[...], (m, n_out)).astype(jnp.float32)
        t = 0
        for a in range(3):
            for d in range(2):
                slab = pad_ref[a:a + rows, d:d + wp, :].astype(bf16).reshape(m, c2)
                acc = acc + jnp.dot(slab, w_ref[t * c2:(t + 1) * c2, :],
                                    preferred_element_type=jnp.float32)
                t += 1
        return acc
    # Narrow-channel path: one matmul with K = 6*c2 (keeps MXU K reasonable).
    cols = [pad_ref[a:a + rows, d:d + wp, :].astype(bf16)
            for a in range(3) for d in range(2)]
    patch = jnp.concatenate(cols, axis=-1).reshape(m, 6 * c2)
    return jnp.dot(patch, w_ref[...], preferred_element_type=jnp.float32) + b_ref[...]


def up_block_kernel(x_ref, skip_ref, wup_ref, bup_ref, w1_ref, b1_ref,
                    w2_ref, b2_ref, o_ref, pad1_ref, pad2_ref):
    # Per grid step (one batch element):
    #   x_ref    : [1, H, W, Cin]      NHWC input to the transposed conv (f32)
    #   skip_ref : [1, H2, W, 2*Cm1]   center-cropped skip, W-parity folded (f32)
    #   wup_ref  : [Cin, 4*Cm1]        conv-transpose taps, cols = (dy, dx, o) (bf16)
    #   bup_ref  : [1, 4*Cm1]          up-conv bias tiled over the 4 taps (f32)
    #   w1_ref   : [12*Cc, 2*Cm2]      folded 3x3 conv1 (bf16), Cc = 2*Cm1
    #   b1_ref   : [1, 2*Cm2]
    #   w2_ref   : [12*Cm2, 2*Cout]    folded 3x3 conv2 (bf16)
    #   b2_ref   : [1, 2*Cout]
    #   o_ref    : [1, H2*W, 2*Cout]   output, W-parity folded (f32)
    #   pad1_ref : [H2+2, W+1, 2*Cc]   zero-haloed folded conv1 input (scratch)
    #   pad2_ref : [H2+2, W+1, 2*Cm2]  zero-haloed folded conv2 input (scratch)
    _, H, W, Cin = x_ref.shape
    H2 = 2 * H
    Cm1 = bup_ref.shape[1] // 4
    Cc = 2 * Cm1
    Cm2 = b1_ref.shape[1] // 2
    Cout = b2_ref.shape[1] // 2
    f32 = jnp.float32
    bf16 = jnp.bfloat16
    M = H2 * W

    # --- zero only the 1-element halo of the padded scratch buffers ---------
    # Kept per grid step on purpose: under dimension_semantics=("parallel",)
    # each TensorCore owns its own scratch, so gating on program_id==0 is unsafe.
    pad1_ref[0:1, :, :] = jnp.zeros((1, W + 1, 2 * Cc), f32)
    pad1_ref[H2 + 1:H2 + 2, :, :] = jnp.zeros((1, W + 1, 2 * Cc), f32)
    pad1_ref[:, 0:1, :] = jnp.zeros((H2 + 2, 1, 2 * Cc), f32)
    pad1_ref[:, W:W + 1, :] = jnp.zeros((H2 + 2, 1, 2 * Cc), f32)
    pad2_ref[0:1, :, :] = jnp.zeros((1, W + 1, 2 * Cm2), f32)
    pad2_ref[H2 + 1:H2 + 2, :, :] = jnp.zeros((1, W + 1, 2 * Cm2), f32)
    pad2_ref[:, 0:1, :] = jnp.zeros((H2 + 2, 1, 2 * Cm2), f32)
    pad2_ref[:, W:W + 1, :] = jnp.zeros((H2 + 2, 1, 2 * Cm2), f32)

    # --- ConvTranspose2d(k=2, s=2): one MXU matmul covering all 4 taps ------
    xf = x_ref[0].reshape(H * W, Cin).astype(bf16)
    up = jnp.dot(xf, wup_ref[...], preferred_element_type=f32) + bup_ref[...]
    u = up.reshape(H, W, 4 * Cm1)                    # cols ordered (dy, dx, c)
    c00 = u[:, :, 0 * Cm1:1 * Cm1]                   # dy=0, dx=0
    c01 = u[:, :, 1 * Cm1:2 * Cm1]                   # dy=0, dx=1
    c10 = u[:, :, 2 * Cm1:3 * Cm1]                   # dy=1, dx=0
    c11 = u[:, :, 3 * Cm1:4 * Cm1]                   # dy=1, dx=1
    # Row interleave = leading-dim-only reshape; the W axis stays parity-folded.
    x1_even = jnp.stack([c00, c10], axis=1).reshape(H2, W, Cm1)   # x1 at even cols
    x1_odd = jnp.stack([c01, c11], axis=1).reshape(H2, W, Cm1)    # x1 at odd cols

    # --- folded, zero-padded conv1 input: 2 merged strip writes -------------
    # Channel layout per parity block: [x1 (Cm1) | skip (Cm1)] (torch cat order).
    sf = skip_ref[0]                                              # [H2, W, 2*Cm1]
    even_blk = jnp.concatenate([x1_even, sf[:, :, 0:Cm1]], axis=-1)        # [H2,W,Cc]
    odd_blk = jnp.concatenate([x1_odd, sf[:, :, Cm1:2 * Cm1]], axis=-1)    # [H2,W,Cc]
    pad1_ref[1:H2 + 1, 1:W + 1, 0:Cc] = odd_blk        # odd col  -> (p=j+1, q=0)
    pad1_ref[1:H2 + 1, 0:W, Cc:2 * Cc] = even_blk      # even col -> (p=j,   q=1)

    # --- conv1 (3x3, pad 1) + bias + ReLU ------------------------------------
    h1 = jnp.maximum(_conv3x3_folded(pad1_ref, w1_ref, b1_ref, H2, W, 2 * Cc),
                     0.0)                                         # [M, 2*Cm2]

    # --- folded, zero-padded conv2 input -------------------------------------
    pad2_ref[1:H2 + 1, 0:W, Cm2:2 * Cm2] = h1[:, 0:Cm2].reshape(H2, W, Cm2)
    pad2_ref[1:H2 + 1, 1:W + 1, 0:Cm2] = h1[:, Cm2:2 * Cm2].reshape(H2, W, Cm2)

    # --- conv2 (3x3, pad 1) + bias + ReLU ------------------------------------
    h2 = jnp.maximum(_conv3x3_folded(pad2_ref, w2_ref, b2_ref, H2, W, 2 * Cm2),
                     0.0)                                         # [M, 2*Cout]

    # --- residual add with x1 (requires Cout == Cm1) --------------------------
    # Re-read x1 from pad1 (still intact) instead of keeping it live across
    # both conv matmuls: trades a cheap strided load for lower vreg pressure.
    x1_even_r = pad1_ref[1:H2 + 1, 0:W, Cc:Cc + Cm1]
    x1_odd_r = pad1_ref[1:H2 + 1, 1:W + 1, 0:Cm1]
    x1f = jnp.concatenate([x1_even_r, x1_odd_r], axis=-1).reshape(M, 2 * Cm1)
    o_ref[0] = h2 + x1f


def _fold_conv3x3(w, b):
    """Fold a torch-layout (O, C, 3, 3) conv for the W-parity-folded im2col.

    Returns Wf [12*C, 2*O] (bf16) and bf [1, 2*O] (f32) so that a 3(row) x
    2(column-pair) window over the folded input (minor = (col-parity q,
    channel c)) times Wf yields both output column parities at once (output
    cols = (px, o)).  Wf[a, d, q, c, px, o] = w[o, c, a, 2*d + q - px] when
    that kw index is valid.
    """
    w = np.asarray(w, np.float32)
    O, C = w.shape[0], w.shape[1]
    wf = np.zeros((3, 2, 2, C, 2, O), np.float32)     # [a, d, q, c, px, o]
    for a in range(3):
        for d in range(2):
            for q in range(2):
                for px in range(2):
                    kb = 2 * d + q - px
                    if 0 <= kb <= 2:
                        wf[a, d, q, :, px, :] = w[:, :, a, kb].T
    bf = np.tile(np.asarray(b, np.float32), 2).reshape(1, 2 * O)
    return jnp.asarray(wf.reshape(12 * C, 2 * O), jnp.bfloat16), jnp.asarray(bf)


def up_block_forward(x_nchw, conc_nchw, params):
    wup, bup, w1, b1, w2, b2 = params     # torch layouts: (I,O,2,2),(O,),(O,I,3,3),(O,)
    N, Cin, H, W = x_nchw.shape
    Cm1 = wup.shape[1]
    Cm2 = w1.shape[0]
    Cout = w2.shape[0]
    H2, W2 = 2 * H, 2 * W
    Cc = 2 * Cm1
    M = H2 * W
    assert w1.shape[1] == Cc
    assert Cout == Cm1, "UpBlock residual add requires out_channels == mid_channels1"

    # glue: NCHW -> NHWC
    x = jnp.transpose(x_nchw, (0, 2, 3, 1)).astype(jnp.float32)          # [N,H,W,Cin]

    # glue: CenterCrop skip to (H2,W2), NCHW -> NHWC, fold W parity into lanes
    Hc, Wc = conc_nchw.shape[2], conc_nchw.shape[3]
    top = int(round((Hc - H2) / 2.0))
    left = int(round((Wc - W2) / 2.0))
    skip = conc_nchw[:, :, top:top + H2, left:left + W2]
    skip = jnp.transpose(skip, (0, 2, 3, 1)).astype(jnp.float32)         # [N,H2,W2,Cm1]
    skip_f = skip.reshape(N, H2, W, 2 * Cm1)                             # (q, c) folded

    # glue: weight packing (MXU operands packed to bf16, biases stay f32)
    wupf = jnp.transpose(wup, (0, 2, 3, 1)).reshape(Cin, 4 * Cm1).astype(jnp.bfloat16)
    bupf = jnp.tile(bup.astype(jnp.float32), 4).reshape(1, 4 * Cm1)
    w1f, b1f = _fold_conv3x3(w1, b1)
    w2f, b2f = _fold_conv3x3(w2, b2)

    # Explicit scoped-VMEM budget from the actual footprint (inputs/outputs are
    # double-buffered by the BlockSpec pipeline), with headroom, clamped to a
    # v7x-safe ceiling.
    f32b, bf16b = 4, 2
    io_bytes = 2 * (H * W * Cin * f32b
                    + H2 * W * 2 * Cm1 * f32b
                    + M * 2 * Cout * f32b
                    + Cin * 4 * Cm1 * bf16b
                    + 12 * Cc * 2 * Cm2 * bf16b
                    + 12 * Cm2 * 2 * Cout * bf16b
                    + (4 * Cm1 + 2 * Cm2 + 2 * Cout) * f32b)
    scratch_bytes = (H2 + 2) * (W + 1) * (2 * Cc + 2 * Cm2) * f32b
    patch_bytes = M * (12 * Cc + 12 * Cm2) * bf16b            # bf16 im2col patches
    live_bytes = M * (2 * Cc + 2 * Cm2 + 6 * Cout) * f32b     # h1/h2/x1 value temps
    vmem_need = io_bytes + scratch_bytes + patch_bytes + live_bytes
    vmem_limit = int(min(max(2 * vmem_need, 16 << 20), 64 << 20))

    out_f = pl.pallas_call(
        up_block_kernel,
        out_shape=jax.ShapeDtypeStruct((N, M, 2 * Cout), jnp.float32),
        grid=(N,),
        in_specs=[
            pl.BlockSpec((1, H, W, Cin), lambda n: (n, 0, 0, 0)),
            pl.BlockSpec((1, H2, W, 2 * Cm1), lambda n: (n, 0, 0, 0)),
            pl.BlockSpec((Cin, 4 * Cm1), lambda n: (0, 0)),
            pl.BlockSpec((1, 4 * Cm1), lambda n: (0, 0)),
            pl.BlockSpec((12 * Cc, 2 * Cm2), lambda n: (0, 0)),
            pl.BlockSpec((1, 2 * Cm2), lambda n: (0, 0)),
            pl.BlockSpec((12 * Cm2, 2 * Cout), lambda n: (0, 0)),
            pl.BlockSpec((1, 2 * Cout), lambda n: (0, 0)),
        ],
        out_specs=pl.BlockSpec((1, M, 2 * Cout), lambda n: (n, 0, 0)),
        scratch_shapes=[
            pltpu.VMEM((H2 + 2, W + 1, 2 * Cc), jnp.float32),
            pltpu.VMEM((H2 + 2, W + 1, 2 * Cm2), jnp.float32),
        ],
        compiler_params=pltpu.CompilerParams(
            dimension_semantics=("parallel",),
            vmem_limit_bytes=vmem_limit),
    )(x, skip_f, wupf, bupf, w1f, b1f, w2f, b2f)

    # glue: un-fold W parity, NHWC -> NCHW (free XLA reshape/transpose)
    out = out_f.reshape(N, H2, W2, Cout)
    return jnp.transpose(out, (0, 3, 1, 2))


def reference(x, conc, wup, bup, w1, b1, w2, b2):
    """Pure-JAX f32 reference for the BN=False UpBlock forward (NCHW)."""
    N, Cin, H, W = x.shape
    Cm1 = wup.shape[1]
    H2, W2 = 2 * H, 2 * W
    hp = jax.lax.Precision.HIGHEST

    # ConvTranspose2d(kernel_size=2, stride=2)
    x1 = jnp.einsum('ncij,cokl->noikjl', x, wup, precision=hp)
    x1 = x1.reshape(N, Cm1, H2, W2) + bup[None, :, None, None]

    # torchvision CenterCrop
    Hc, Wc = conc.shape[2], conc.shape[3]
    top = int(round((Hc - H2) / 2.0))
    left = int(round((Wc - W2) / 2.0))
    cl = conc[:, :, top:top + H2, left:left + W2]

    xin = jnp.concatenate([x1, cl], axis=1)

    def conv_relu(inp, w, b):
        out = jax.lax.conv_general_dilated(
            inp, w, window_strides=(1, 1), padding="SAME",
            dimension_numbers=("NCHW", "OIHW", "NCHW"), precision=hp)
        return jax.nn.relu(out + b[None, :, None, None])

    h = conv_relu(xin, w1, b1)
    h = conv_relu(h, w2, b2)
    return h + x1


if __name__ == "__main__":
    key = jax.random.PRNGKey(0)
    # UpBlock(in_channels=8, mid_channels1=4, mid_channels2=8, out_channels=4, BN=False)
    N, Cin, H, W = 2, 8, 8, 8
    Cm1, Cm2, Cout = 4, 8, 4
    Hc = Wc = 2 * H + 2          # skip is larger than 2H x 2W -> exercises CenterCrop

    ks = jax.random.split(key, 8)
    x = jax.random.normal(ks[0], (N, Cin, H, W), jnp.float32)
    conc = jax.random.normal(ks[1], (N, Cm1, Hc, Wc), jnp.float32)
    wup = jax.random.normal(ks[2], (Cin, Cm1, 2, 2), jnp.float32) * 0.2
    bup = jax.random.normal(ks[3], (Cm1,), jnp.float32) * 0.1
    w1 = jax.random.normal(ks[4], (Cm2, 2 * Cm1, 3, 3), jnp.float32) * 0.1
    b1 = jax.random.normal(ks[5], (Cm2,), jnp.float32) * 0.1
    w2 = jax.random.normal(ks[6], (Cout, Cm2, 3, 3), jnp.float32) * 0.1
    b2 = jax.random.normal(ks[7], (Cout,), jnp.float32) * 0.1

    y = up_block_forward(x, conc, (wup, bup, w1, b1, w2, b2))
    y = jax.block_until_ready(y)

    y_ref = reference(x, conc, wup, bup, w1, b1, w2, b2)
    max_err = float(jnp.max(jnp.abs(y - y_ref)))
    # bf16 MXU operands (f32 accumulate) vs HIGHEST-precision f32 reference.
    assert jnp.allclose(y, y_ref, atol=5e-2, rtol=5e-2), f"max_err={max_err}"
    print("KERNEL_OK")
</pallas_src>

<mosaic_0001>
module attributes {stable_mosaic.version = 11 : i64} {
  func.func @up_block_kernel(%arg0: i32, %arg1: memref<1x8x8x8xf32, #tpu.memory_space<vmem>>, %arg2: memref<1x16x8x8xf32, #tpu.memory_space<vmem>>, %arg3: memref<8x16xbf16, #tpu.memory_space<vmem>>, %arg4: memref<1x16xf32, #tpu.memory_space<vmem>>, %arg5: memref<96x16xbf16, #tpu.memory_space<vmem>>, %arg6: memref<1x16xf32, #tpu.memory_space<vmem>>, %arg7: memref<96x8xbf16, #tpu.memory_space<vmem>>, %arg8: memref<1x8xf32, #tpu.memory_space<vmem>>, %arg9: memref<1x128x8xf32, #tpu.memory_space<vmem>>, %arg10: memref<18x9x16xf32, #tpu.memory_space<vmem>>, %arg11: memref<18x9x16xf32, #tpu.memory_space<vmem>>) attributes {dimension_semantics = [#tpu.dimension_semantics<parallel>], iteration_bounds = array<i64: 2>, scalar_prefetch = 0 : i64, scratch_operands = 2 : i64, tpu.core_type = #tpu.core_type<tc>, window_params = [{transform_indices = @transform_0, window_bounds = array<i64: 1, 8, 8, 8>}, {transform_indices = @transform_1, window_bounds = array<i64: 1, 16, 8, 8>}, {pipeline_mode = #tpu.pipeline_mode<synchronous>, transform_indices = @transform_2, window_bounds = array<i64: 8, 16>}, {pipeline_mode = #tpu.pipeline_mode<synchronous>, transform_indices = @transform_3, window_bounds = array<i64: 1, 16>}, {pipeline_mode = #tpu.pipeline_mode<synchronous>, transform_indices = @transform_4, window_bounds = array<i64: 96, 16>}, {pipeline_mode = #tpu.pipeline_mode<synchronous>, transform_indices = @transform_5, window_bounds = array<i64: 1, 16>}, {pipeline_mode = #tpu.pipeline_mode<synchronous>, transform_indices = @transform_6, window_bounds = array<i64: 96, 8>}, {pipeline_mode = #tpu.pipeline_mode<synchronous>, transform_indices = @transform_7, window_bounds = array<i64: 1, 8>}, {transform_indices = @transform_8, window_bounds = array<i64: 1, 128, 8>}]} {
    %cst = arith.constant 0.000000e+00 : f32
    %0 = vector.broadcast %cst : f32 to vector<1x9x16xf32>
    %c0 = arith.constant 0 : index
    %c0_0 = arith.constant 0 : index
    %c0_1 = arith.constant 0 : index
    %1 = vector.load %arg10[%c0, %c0_0, %c0_1] : memref<18x9x16xf32, #tpu.memory_space<vmem>>, vector<1x9x16xf32>
    tpu.vector_store %arg10[%c0, %c0_0, %c0_1], %0 {strides = array<i32>} : memref<18x9x16xf32, #tpu.memory_space<vmem>>, vector<1x9x16xf32>,
    %cst_2 = arith.constant 0.000000e+00 : f32
    %2 = vector.broadcast %cst_2 : f32 to vector<1x9x16xf32>
    %c17 = arith.constant 17 : index
    %c0_3 = arith.constant 0 : index
    %c0_4 = arith.constant 0 : index
    %3 = vector.load %arg10[%c17, %c0_3, %c0_4] : memref<18x9x16xf32, #tpu.memory_space<vmem>>, vector<1x9x16xf32>
    tpu.vector_store %arg10[%c17, %c0_3, %c0_4], %2 {strides = array<i32>} : memref<18x9x16xf32, #tpu.memory_space<vmem>>, vector<1x9x16xf32>,
    %cst_5 = arith.constant 0.000000e+00 : f32
    %4 = vector.broadcast %cst_5 : f32 to vector<18x1x16xf32>
    %c0_6 = arith.constant 0 : index
    %c0_7 = arith.constant 0 : index
    %c0_8 = arith.constant 0 : index
    %5 = vector.load %arg10[%c0_6, %c0_7, %c0_8] : memref<18x9x16xf32, #tpu.memory_space<vmem>>, vector<18x1x16xf32>
    tpu.vector_store %arg10[%c0_6, %c0_7, %c0_8], %4 {strides = array<i32>} : memref<18x9x16xf32, #tpu.memory_space<vmem>>, vector<18x1x16xf32>,
    %cst_9 = arith.constant 0.000000e+00 : f32
    %6 = vector.broadcast %cst_9 : f32 to vector<18x1x16xf32>
    %c0_10 = arith.constant 0 : index
    %c8 = arith.constant 8 : index
    %c0_11 = arith.constant 0 : index
    %7 = vector.load %arg10[%c0_10, %c8, %c0_11] : memref<18x9x16xf32, #tpu.memory_space<vmem>>, vector<18x1x16xf32>
    tpu.vector_store %arg10[%c0_10, %c8, %c0_11], %6 {strides = array<i32>} : memref<18x9x16xf32, #tpu.memory_space<vmem>>, vector<18x1x16xf32>,
    %cst_12 = arith.constant 0.000000e+00 : f32
    %8 = vector.broadcast %cst_12 : f32 to vector<1x9x16xf32>
    %c0_13 = arith.constant 0 : index
    %c0_14 = arith.constant 0 : index
    %c0_15 = arith.constant 0 : index
    %9 = vector.load %arg11[%c0_13, %c0_14, %c0_15] : memref<18x9x16xf32, #tpu.memory_space<vmem>>, vector<1x9x16xf32>
    tpu.vector_store %arg11[%c0_13, %c0_14, %c0_15], %8 {strides = array<i32>} : memref<18x9x16xf32, #tpu.memory_space<vmem>>, vector<1x9x16xf32>,
    %cst_16 = arith.constant 0.000000e+00 : f32
    %10 = vector.broadcast %cst_16 : f32 to vector<1x9x16xf32>
    %c17_17 = arith.constant 17 : index
    %c0_18 = arith.constant 0 : index
    %c0_19 = arith.constant 0 : index
    %11 = vector.load %arg11[%c17_17, %c0_18, %c0_19] : memref<18x9x16xf32, #tpu.memory_space<vmem>>, vector<1x9x16xf32>
    tpu.vector_store %arg11[%c17_17, %c0_18, %c0_19], %10 {strides = array<i32>} : memref<18x9x16xf32, #tpu.memory_space<vmem>>, vector<1x9x16xf32>,
    %cst_20 = arith.constant 0.000000e+00 : f32
    %12 = vector.broadcast %cst_20 : f32 to vector<18x1x16xf32>
    %c0_21 = arith.constant 0 : index
    %c0_22 = arith.constant 0 : index
    %c0_23 = arith.constant 0 : index
    %13 = vector.load %arg11[%c0_21, %c0_22, %c0_23] : memref<18x9x16xf32, #tpu.memory_space<vmem>>, vector<18x1x16xf32>
    tpu.vector_store %arg11[%c0_21, %c0_22, %c0_23], %12 {strides = array<i32>} : memref<18x9x16xf32, #tpu.memory_space<vmem>>, vector<18x1x16xf32>,
    %cst_24 = arith.constant 0.000000e+00 : f32
    %14 = vector.broadcast %cst_24 : f32 to vector<18x1x16xf32>
    %c0_25 = arith.constant 0 : index
    %c8_26 = arith.constant 8 : index
    %c0_27 = arith.constant 0 : index
    %15 = vector.load %arg11[%c0_25, %c8_26, %c0_27] : memref<18x9x16xf32, #tpu.memory_space<vmem>>, vector<18x1x16xf32>
    tpu.vector_store %arg11[%c0_25, %c8_26, %c0_27], %14 {strides = array<i32>} : memref<18x9x16xf32, #tpu.memory_space<vmem>>, vector<18x1x16xf32>,
    %c0_28 = arith.constant 0 : index
    %c0_29 = arith.constant 0 : index
    %c0_30 = arith.constant 0 : index
    %c0_31 = arith.constant 0 : index
    %16 = vector.load %arg1[%c0_28, %c0_29, %c0_30, %c0_31] : memref<1x8x8x8xf32, #tpu.memory_space<vmem>>, vector<1x8x8x8xf32>
    %17 = vector.shape_cast %16 : vector<1x8x8x8xf32> to vector<8x8x8xf32>
    %18 = vector.shape_cast %17 : vector<8x8x8xf32> to vector<64x8xf32>
    %19 = arith.truncf %18 : vector<64x8xf32> to vector<64x8xbf16>
    %c0_32 = arith.constant 0 : index
    %c0_33 = arith.constant 0 : index
    %20 = vector.load %arg3[%c0_32, %c0_33] : memref<8x16xbf16, #tpu.memory_space<vmem>>, vector<8x16xbf16>
    %cst_34 = arith.constant dense<0.000000e+00> : vector<64x16xf32>
    %21 = tpu.matmul %19, %20, %cst_34 {dimension_numbers = #tpu.dot_dimension_numbers<[1], [0], [0], [1], [0, 0, 1, 1], [], []>} : vector<64x8xbf16>, vector<8x16xbf16>, vector<64x16xf32> -> vector<64x16xf32>
    %c0_35 = arith.constant 0 : index
    %c0_36 = arith.constant 0 : index
    %22 = vector.load %arg4[%c0_35, %c0_36] : memref<1x16xf32, #tpu.memory_space<vmem>>, vector<1x16xf32>
    %23 = vector.broadcast %22 : vector<1x16xf32> to vector<64x16xf32>
    %24 = arith.addf %21, %23 : vector<64x16xf32>
    %25 = vector.shape_cast %24 : vector<64x16xf32> to vector<8x8x16xf32>
    %26 = vector.extract_strided_slice %25 {offsets = [0, 0, 0], sizes = [8, 8, 4], strides = [1, 1, 1]} : vector<8x8x16xf32> to vector<8x8x4xf32>
    %27 = vector.extract_strided_slice %25 {offsets = [0, 0, 4], sizes = [8, 8, 4], strides = [1, 1, 1]} : vector<8x8x16xf32> to vector<8x8x4xf32>
    %28 = vector.extract_strided_slice %25 {offsets = [0, 0, 8], sizes = [8, 8, 4], strides = [1, 1, 1]} : vector<8x8x16xf32> to vector<8x8x4xf32>
    %29 = vector.extract_strided_slice %25 {offsets = [0, 0, 12], sizes = [8, 8, 4], strides = [1, 1, 1]} : vector<8x8x16xf32> to vector<8x8x4xf32>
    %30 = vector.shape_cast %26 : vector<8x8x4xf32> to vector<8x1x8x4xf32>
    %31 = vector.shape_cast %28 : vector<8x8x4xf32> to vector<8x1x8x4xf32>
    %32 = tpu.concatenate %30, %31 in 1 : vector<8x1x8x4xf32>, vector<8x1x8x4xf32> -> vector<8x2x8x4xf32>
    %33 = vector.shape_cast %32 : vector<8x2x8x4xf32> to vector<16x8x4xf32>
    %34 = vector.shape_cast %27 : vector<8x8x4xf32> to vector<8x1x8x4xf32>
    %35 = vector.shape_cast %29 : vector<8x8x4xf32> to vector<8x1x8x4xf32>
    %36 = tpu.concatenate %34, %35 in 1 : vector<8x1x8x4xf32>, vector<8x1x8x4xf32> -> vector<8x2x8x4xf32>
    %37 = vector.shape_cast %36 : vector<8x2x8x4xf32> to vector<16x8x4xf32>
    %c0_37 = arith.constant 0 : index
    %c0_38 = arith.constant 0 : index
    %c0_39 = arith.constant 0 : index
    %c0_40 = arith.constant 0 : index
    %38 = vector.load %arg2[%c0_37, %c0_38, %c0_39, %c0_40] : memref<1x16x8x8xf32, #tpu.memory_space<vmem>>, vector<1x16x8x8xf32>
    %39 = vector.shape_cast %38 : vector<1x16x8x8xf32> to vector<16x8x8xf32>
    %40 = vector.extract_strided_slice %39 {offsets = [0, 0, 0], sizes = [16, 8, 4], strides = [1, 1, 1]} : vector<16x8x8xf32> to vector<16x8x4xf32>
    %41 = tpu.concatenate %33, %40 in 2 : vector<16x8x4xf32>, vector<16x8x4xf32> -> vector<16x8x8xf32>
    %42 = vector.extract_strided_slice %39 {offsets = [0, 0, 4], sizes = [16, 8, 4], strides = [1, 1, 1]} : vector<16x8x8xf32> to vector<16x8x4xf32>
    %43 = tpu.concatenate %37, %42 in 2 : vector<16x8x4xf32>, vector<16x8x4xf32> -> vector<16x8x8xf32>
    %c1 = arith.constant 1 : index
    %c1_41 = arith.constant 1 : index
    %c0_42 = arith.constant 0 : index
    %44 = vector.load %arg10[%c1, %c1_41, %c0_42] : memref<18x9x16xf32, #tpu.memory_space<vmem>>, vector<16x8x8xf32>
    tpu.vector_store %arg10[%c1, %c1_41, %c0_42], %43 {strides = array<i32>} : memref<18x9x16xf32, #tpu.memory_space<vmem>>, vector<16x8x8xf32>,
    %c1_43 = arith.constant 1 : index
    %c0_44 = arith.constant 0 : index
    %c8_45 = arith.constant 8 : index
    %45 = vector.load %arg10[%c1_43, %c0_44, %c8_45] : memref<18x9x16xf32, #tpu.memory_space<vmem>>, vector<16x8x8xf32>
    tpu.vector_store %arg10[%c1_43, %c0_44, %c8_45], %41 {strides = array<i32>} : memref<18x9x16xf32, #tpu.memory_space<vmem>>, vector<16x8x8xf32>,
    %c0_46 = arith.constant 0 : index
    %c0_47 = arith.constant 0 : index
    %c0_48 = arith.constant 0 : index
    %46 = vector.load %arg10[%c0_46, %c0_47, %c0_48] : memref<18x9x16xf32, #tpu.memory_space<vmem>>, vector<16x8x16xf32>
    %47 = arith.truncf %46 : vector<16x8x16xf32> to vector<16x8x16xbf16>
    %c0_49 = arith.constant 0 : index
    %c1_50 = arith.constant 1 : index
    %c0_51 = arith.constant 0 : index
    %48 = vector.load %arg10[%c0_49, %c1_50, %c0_51] : memref<18x9x16xf32, #tpu.memory_space<vmem>>, vector<16x8x16xf32>
    %49 = arith.truncf %48 : vector<16x8x16xf32> to vector<16x8x16xbf16>
    %c1_52 = arith.constant 1 : index
    %c0_53 = arith.constant 0 : index
    %c0_54 = arith.constant 0 : index
    %50 = vector.load %arg10[%c1_52, %c0_53, %c0_54] : memref<18x9x16xf32, #tpu.memory_space<vmem>>, vector<16x8x16xf32>
    %51 = arith.truncf %50 : vector<16x8x16xf32> to vector<16x8x16xbf16>
    %c1_55 = arith.constant 1 : index
    %c1_56 = arith.constant 1 : index
    %c0_57 = arith.constant 0 : index
    %52 = vector.load %arg10[%c1_55, %c1_56, %c0_57] : memref<18x9x16xf32, #tpu.memory_space<vmem>>, vector<16x8x16xf32>
    %53 = arith.truncf %52 : vector<16x8x16xf32> to vector<16x8x16xbf16>
    %c2 = arith.constant 2 : index
    %c0_58 = arith.constant 0 : index
    %c0_59 = arith.constant 0 : index
    %54 = vector.load %arg10[%c2, %c0_58, %c0_59] : memref<18x9x16xf32, #tpu.memory_space<vmem>>, vector<16x8x16xf32>
    %55 = arith.truncf %54 : vector<16x8x16xf32> to vector<16x8x16xbf16>
    %c2_60 = arith.constant 2 : index
    %c1_61 = arith.constant 1 : index
    %c0_62 = arith.constant 0 : index
    %56 = vector.load %arg10[%c2_60, %c1_61, %c0_62] : memref<18x9x16xf32, #tpu.memory_space<vmem>>, vector<16x8x16xf32>
    %57 = arith.truncf %56 : vector<16x8x16xf32> to vector<16x8x16xbf16>
    %58 = tpu.concatenate %47, %49, %51, %53, %55, %57 in 2 : vector<16x8x16xbf16>, vector<16x8x16xbf16>, vector<16x8x16xbf16>, vector<16x8x16xbf16>, vector<16x8x16xbf16>, vector<16x8x16xbf16> -> vector<16x8x96xbf16>
    %59 = vector.shape_cast %58 : vector<16x8x96xbf16> to vector<128x96xbf16>
    %c0_63 = arith.constant 0 : index
    %c0_64 = arith.constant 0 : index
    %60 = vector.load %arg5[%c0_63, %c0_64] : memref<96x16xbf16, #tpu.memory_space<vmem>>, vector<96x16xbf16>
    %cst_65 = arith.constant dense<0.000000e+00> : vector<128x16xf32>
    %61 = tpu.matmul %59, %60, %cst_65 {dimension_numbers = #tpu.dot_dimension_numbers<[1], [0], [0], [1], [0, 0, 1, 1], [], []>} : vector<128x96xbf16>, vector<96x16xbf16>, vector<128x16xf32> -> vector<128x16xf32>
    %c0_66 = arith.constant 0 : index
    %c0_67 = arith.constant 0 : index
    %62 = vector.load %arg6[%c0_66, %c0_67] : memref<1x16xf32, #tpu.memory_space<vmem>>, vector<1x16xf32>
    %63 = vector.broadcast %62 : vector<1x16xf32> to vector<128x16xf32>
    %64 = arith.addf %61, %63 : vector<128x16xf32>
    %cst_68 = arith.constant 0.000000e+00 : f32
    %65 = vector.broadcast %cst_68 : f32 to vector<128x16xf32>
    %66 = arith.maximumf %64, %65 : vector<128x16xf32>
    %67 = vector.extract_strided_slice %66 {offsets = [0, 0], sizes = [128, 8], strides = [1, 1]} : vector<128x16xf32> to vector<128x8xf32>
    %68 = vector.shape_cast %67 : vector<128x8xf32> to vector<16x8x8xf32>
    %c1_69 = arith.constant 1 : index
    %c0_70 = arith.constant 0 : index
    %c8_71 = arith.constant 8 : index
    %69 = vector.load %arg11[%c1_69, %c0_70, %c8_71] : memref<18x9x16xf32, #tpu.memory_space<vmem>>, vector<16x8x8xf32>
    tpu.vector_store %arg11[%c1_69, %c0_70, %c8_71], %68 {strides = array<i32>} : memref<18x9x16xf32, #tpu.memory_space<vmem>>, vector<16x8x8xf32>,
    %70 = vector.extract_strided_slice %66 {offsets = [0, 8], sizes = [128, 8], strides = [1, 1]} : vector<128x16xf32> to vector<128x8xf32>
    %71 = vector.shape_cast %70 : vector<128x8xf32> to vector<16x8x8xf32>
    %c1_72 = arith.constant 1 : index
    %c1_73 = arith.constant 1 : index
    %c0_74 = arith.constant 0 : index
    %72 = vector.load %arg11[%c1_72, %c1_73, %c0_74] : memref<18x9x16xf32, #tpu.memory_space<vmem>>, vector<16x8x8xf32>
    tpu.vector_store %arg11[%c1_72, %c1_73, %c0_74], %71 {strides = array<i32>} : memref<18x9x16xf32, #tpu.memory_space<vmem>>, vector<16x8x8xf32>,
    %c0_75 = arith.constant 0 : index
    %c0_76 = arith.constant 0 : index
    %c0_77 = arith.constant 0 : index
    %73 = vector.load %arg11[%c0_75, %c0_76, %c0_77] : memref<18x9x16xf32, #tpu.memory_space<vmem>>, vector<16x8x16xf32>
    %74 = arith.truncf %73 : vector<16x8x16xf32> to vector<16x8x16xbf16>
    %c0_78 = arith.constant 0 : index
    %c1_79 = arith.constant 1 : index
    %c0_80 = arith.constant 0 : index
    %75 = vector.load %arg11[%c0_78, %c1_79, %c0_80] : memref<18x9x16xf32, #tpu.memory_space<vmem>>, vector<16x8x16xf32>
    %76 = arith.truncf %75 : vector<16x8x16xf32> to vector<16x8x16xbf16>
    %c1_81 = arith.constant 1 : index
    %c0_82 = arith.constant 0 : index
    %c0_83 = arith.constant 0 : index
    %77 = vector.load %arg11[%c1_81, %c0_82, %c0_83] : memref<18x9x16xf32, #tpu.memory_space<vmem>>, vector<16x8x16xf32>
    %78 = arith.truncf %77 : vector<16x8x16xf32> to vector<16x8x16xbf16>
    %c1_84 = arith.constant 1 : index
    %c1_85 = arith.constant 1 : index
    %c0_86 = arith.constant 0 : index
    %79 = vector.load %arg11[%c1_84, %c1_85, %c0_86] : memref<18x9x16xf32, #tpu.memory_space<vmem>>, vector<16x8x16xf32>
    %80 = arith.truncf %79 : vector<16x8x16xf32> to vector<16x8x16xbf16>
    %c2_87 = arith.constant 2 : index
    %c0_88 = arith.constant 0 : index
    %c0_89 = arith.constant 0 : index
    %81 = vector.load %arg11[%c2_87, %c0_88, %c0_89] : memref<18x9x16xf32, #tpu.memory_space<vmem>>, vector<16x8x16xf32>
    %82 = arith.truncf %81 : vector<16x8x16xf32> to vector<16x8x16xbf16>
    %c2_90 = arith.constant 2 : index
    %c1_91 = arith.constant 1 : index
    %c0_92 = arith.constant 0 : index
    %83 = vector.load %arg11[%c2_90, %c1_91, %c0_92] : memref<18x9x16xf32, #tpu.memory_space<vmem>>, vector<16x8x16xf32>
    %84 = arith.truncf %83 : vector<16x8x16xf32> to vector<16x8x16xbf16>
    %85 = tpu.concatenate %74, %76, %78, %80, %82, %84 in 2 : vector<16x8x16xbf16>, vector<16x8x16xbf16>, vector<16x8x16xbf16>, vector<16x8x16xbf16>, vector<16x8x16xbf16>, vector<16x8x16xbf16> -> vector<16x8x96xbf16>
    %86 = vector.shape_cast %85 : vector<16x8x96xbf16> to vector<128x96xbf16>
    %c0_93 = arith.constant 0 : index
    %c0_94 = arith.constant 0 : index
    %87 = vector.load %arg7[%c0_93, %c0_94] : memref<96x8xbf16, #tpu.memory_space<vmem>>, vector<96x8xbf16>
    %cst_95 = arith.constant dense<0.000000e+00> : vector<128x8xf32>
    %88 = tpu.matmul %86, %87, %cst_95 {dimension_numbers = #tpu.dot_dimension_numbers<[1], [0], [0], [1], [0, 0, 1, 1], [], []>} : vector<128x96xbf16>, vector<96x8xbf16>, vector<128x8xf32> -> vector<128x8xf32>
    %c0_96 = arith.constant 0 : index
    %c0_97 = arith.constant 0 : index
    %89 = vector.load %arg8[%c0_96, %c0_97] : memref<1x8xf32, #tpu.memory_space<vmem>>, vector<1x8xf32>
    %90 = vector.broadcast %89 : vector<1x8xf32> to vector<128x8xf32>
    %91 = arith.addf %88, %90 : vector<128x8xf32>
    %cst_98 = arith.constant 0.000000e+00 : f32
    %92 = vector.broadcast %cst_98 : f32 to vector<128x8xf32>
    %93 = arith.maximumf %91, %92 : vector<128x8xf32>
    %c1_99 = arith.constant 1 : index
    %c0_100 = arith.constant 0 : index
    %c8_101 = arith.constant 8 : index
    %94 = vector.load %arg10[%c1_99, %c0_100, %c8_101] : memref<18x9x16xf32, #tpu.memory_space<vmem>>, vector<16x8x4xf32>
    %c1_102 = arith.constant 1 : index
    %c1_103 = arith.constant 1 : index
    %c0_104 = arith.constant 0 : index
    %95 = vector.load %arg10[%c1_102, %c1_103, %c0_104] : memref<18x9x16xf32, #tpu.memory_space<vmem>>, vector<16x8x4xf32>
    %96 = tpu.concatenate %94, %95 in 2 : vector<16x8x4xf32>, vector<16x8x4xf32> -> vector<16x8x8xf32>
    %97 = vector.shape_cast %96 : vector<16x8x8xf32> to vector<128x8xf32>
    %98 = arith.addf %93, %97 : vector<128x8xf32>
    %c0_105 = arith.constant 0 : index
    %c0_106 = arith.constant 0 : index
    %c0_107 = arith.constant 0 : index
    %99 = vector.load %arg9[%c0_105, %c0_106, %c0_107] : memref<1x128x8xf32, #tpu.memory_space<vmem>>, vector<1x128x8xf32>
    %100 = vector.shape_cast %99 : vector<1x128x8xf32> to vector<128x8xf32>
    %101 = vector.shape_cast %98 : vector<128x8xf32> to vector<1x128x8xf32>
    tpu.vector_store %arg9[%c0_105, %c0_106, %c0_107], %101 {strides = array<i32>} : memref<1x128x8xf32, #tpu.memory_space<vmem>>, vector<1x128x8xf32>,
    return
  }
  func.func @transform_0(%arg0: i32) -> (i32, i32, i32, i32) {
    %c0_i32 = arith.constant 0 : i32
    %c0_i32_0 = arith.constant 0 : i32
    %c0_i32_1 = arith.constant 0 : i32
    %c0_i32_2 = arith.constant 0 : i32
    return %arg0, %c0_i32, %c0_i32_0, %c0_i32_1 : i32, i32, i32, i32
  }
  func.func @transform_1(%arg0: i32) -> (i32, i32, i32, i32) {
    %c0_i32 = arith.constant 0 : i32
    %c0_i32_0 = arith.constant 0 : i32
    %c0_i32_1 = arith.constant 0 : i32
    %c0_i32_2 = arith.constant 0 : i32
    return %arg0, %c0_i32, %c0_i32_0, %c0_i32_1 : i32, i32, i32, i32
  }
  func.func @transform_2(%arg0: i32) -> (i32, i32) {
    %c0_i32 = arith.constant 0 : i32
    %c0_i32_0 = arith.constant 0 : i32
    %c0_i32_1 = arith.constant 0 : i32
    return %c0_i32, %c0_i32_0 : i32, i32
  }
  func.func @transform_3(%arg0: i32) -> (i32, i32) {
    %c0_i32 = arith.constant 0 : i32
    %c0_i32_0 = arith.constant 0 : i32
    %c0_i32_1 = arith.constant 0 : i32
    return %c0_i32, %c0_i32_0 : i32, i32
  }
  func.func @transform_4(%arg0: i32) -> (i32, i32) {
    %c0_i32 = arith.constant 0 : i32
    %c0_i32_0 = arith.constant 0 : i32
    %c0_i32_1 = arith.constant 0 : i32
    return %c0_i32, %c0_i32_0 : i32, i32
  }
  func.func @transform_5(%arg0: i32) -> (i32, i32) {
    %c0_i32 = arith.constant 0 : i32
    %c0_i32_0 = arith.constant 0 : i32
    %c0_i32_1 = arith.constant 0 : i32
    return %c0_i32, %c0_i32_0 : i32, i32
  }
  func.func @transform_6(%arg0: i32) -> (i32, i32) {
    %c0_i32 = arith.constant 0 : i32
    %c0_i32_0 = arith.constant 0 : i32
    %c0_i32_1 = arith.constant 0 : i32
    return %c0_i32, %c0_i32_0 : i32, i32
  }
  func.func @transform_7(%arg0: i32) -> (i32, i32) {
    %c0_i32 = arith.constant 0 : i32
    %c0_i32_0 = arith.constant 0 : i32
    %c0_i32_1 = arith.constant 0 : i32
    return %c0_i32, %c0_i32_0 : i32, i32
  }
  func.func @transform_8(%arg0: i32) -> (i32, i32, i32) {
    %c0_i32 = arith.constant 0 : i32
    %c0_i32_0 = arith.constant 0 : i32
    %c0_i32_1 = arith.constant 0 : i32
    return %arg0, %c0_i32, %c0_i32_0 : i32, i32, i32
  }
}

</mosaic_0001>

<llo_original>
// kernel: tpu_custom_call.1
$region0: #{tpu_custom_call.1}
  #allocation0 [shape = 'u32[]', space=smem, size = 0x4, offset = 0x4, fixed_abs, tag = 'smem constant byte address 0x4 - core index']
  #allocation1 [shape = 'u32[144,128]{1,0:T(1,128)}', space=vmem, size = 0x12000, scoped, tag = 'internal scratch']
  #allocation2 [shape = 'f32[18,9,16]{2,1,0:T(8,128)}', space=vmem, size = 0x24000, scoped, tag = 'scratch operand']
  #allocation3 [shape = 'f32[18,9,16]{2,1,0:T(8,128)}', space=vmem, size = 0x24000, scoped, tag = 'scratch operand']
  %s0 = inlined_call_operand.vmem [shape: f32[2,8,8,8], index: 0, kind: input, shape index: {}]
  %s1 = inlined_call_operand.vmem [shape: f32[2,16,8,8], index: 1, kind: input, shape index: {}]
  %s2 = inlined_call_operand.vmem [shape: bf16[8,16], index: 2, kind: input, shape index: {}]
  %s3 = inlined_call_operand.vmem [shape: f32[1,16], index: 3, kind: input, shape index: {}]
  %s4 = inlined_call_operand.vmem [shape: bf16[96,16], index: 4, kind: input, shape index: {}]
  %s5 = inlined_call_operand.vmem [shape: f32[1,16], index: 5, kind: input, shape index: {}]
  %s6 = inlined_call_operand.vmem [shape: bf16[96,8], index: 6, kind: input, shape index: {}]
  %s7 = inlined_call_operand.vmem [shape: f32[1,8], index: 7, kind: input, shape index: {}]
  %s8 = inlined_call_operand.vmem [shape: f32[2,128,8], index: 8, kind: output, shape index: {}]
  %s9 = sld [smem:[#allocation0]]
  $region65: #{tpu_custom_call.1} parent=0
    _
  %s11 = ssub.s32 1, %s9
  %s12 = scalar_select 0, %s11, %s9
  loop: start=0, step=1, limit=4
  $region2: #{tpu_custom_call.1} parent=0 // loop_pre_header
    _
  $region3: #{tpu_custom_call.1} parent=0 // loop_header
    %s14 = sphi 0, %s18
    %p15 = scmp.ge.s32.totalorder %s14, 4
    %s24 = sphi 0, %s26
    %s27 = sphi 0, %s24
    %s28 = sphi 0, %s27
    %s44 = sphi 0, %s28
    %s50 = sphi 0, %s52
    %s53 = sphi 0, %s50
    %s54 = sphi 0, %s53
    %s70 = sphi 0, %s54
    %s74 = sphi 0, %s74
    %s76 = sphi 0, %s74
    %s77 = sphi 0, %s76
    %s91 = sphi 0, %s77
    %s95 = sphi 0, %s95
    %s97 = sphi 0, %s95
    %s98 = sphi 0, %s97
    %s112 = sphi 0, %s98
    %s116 = sphi 0, %s116
    %s118 = sphi 0, %s116
    %s119 = sphi 0, %s118
    %s133 = sphi 0, %s119
    %s137 = sphi 0, %s137
    %s139 = sphi 0, %s137
    %s140 = sphi 0, %s139
    %s154 = sphi 0, %s140
    %s158 = sphi 0, %s158
    %s160 = sphi 0, %s158
    %s161 = sphi 0, %s160
    %s175 = sphi 0, %s161
    %s179 = sphi 0, %s179
    %s181 = sphi 0, %s179
    %s182 = sphi 0, %s181
    %s196 = sphi 0, %s182
    %s202 = sphi 0, %s204
    %s205 = sphi 0, %s202
    %s206 = sphi 0, %s205
    %s222 = sphi 0, %s206
  $region4: #{tpu_custom_call.1} parent=0 // loop_header_branch
    %17 = sbr.rel (%p15) target = $region8
  $region5: #{tpu_custom_call.1} parent=0 // loop_body
    %s19 = ssub.s32 %s14, 1
    %s20 = ssub.s32 %s14, 2
    %s21 = sadd.s32 %s14, 1
    %s22 = ssub.s32 %s14, %s21
    %p23 = scmp.eq.s32.totalorder %s22, 0
    %s25 = sadd.s32 %s24, 1
    %s26 = scalar_select %p23, %s24, %s25
    %p29 = pneg %p23
    %p30 = scmp.eq.s32.totalorder %s14, 1
    %p31 = por %p29, %p30
    %p32 = scmp.ne.s32.totalorder %s24, %s27
    %p33 = scmp.eq.s32.totalorder %s14, 0
    %p34 = por %p32, %p33
    %p35 = scmp.ne.s32.totalorder %s24, %s27
    %p36 = scmp.eq.s32.totalorder %s19, 1
    %p37 = por %p35, %p36
    %p38 = scmp.ne.s32.totalorder %s27, %s28
    %p39 = scmp.eq.s32.totalorder %s19, 0
    %p40 = por %p38, %p39
    %p41 = scmp.ne.s32.totalorder %s27, %s28
    %p42 = scmp.eq.s32.totalorder %s20, 1
    %p43 = por %p41, %p42
    %p45 = scmp.ne.s32.totalorder %s28, %s44
    %p46 = scmp.eq.s32.totalorder %s20, 0
    %p47 = por %p45, %p46
    %s48 = ssub.s32 %s14, %s21
    %p49 = scmp.eq.s32.totalorder %s48, 0
    %s51 = sadd.s32 %s50, 1
    %s52 = scalar_select %p49, %s50, %s51
    %p55 = pneg %p49
    %p56 = scmp.eq.s32.totalorder %s14, 1
    %p57 = por %p55, %p56
    %p58 = scmp.ne.s32.totalorder %s50, %s53
    %p59 = scmp.eq.s32.totalorder %s14, 0
    %p60 = por %p58, %p59
    %p61 = scmp.ne.s32.totalorder %s50, %s53
    %p62 = scmp.eq.s32.totalorder %s19, 1
    %p63 = por %p61, %p62
    %p64 = scmp.ne.s32.totalorder %s53, %s54
    %p65 = scmp.eq.s32.totalorder %s19, 0
    %p66 = por %p64, %p65
    %p67 = scmp.ne.s32.totalorder %s53, %s54
    %p68 = scmp.eq.s32.totalorder %s20, 1
    %p69 = por %p67, %p68
    %p71 = scmp.ne.s32.totalorder %s54, %s70
    %p72 = scmp.eq.s32.totalorder %s20, 0
    %p73 = por %p71, %p72
    %s75 = sadd.s32 %s74, 1
    %p78 = scmp.eq.s32.totalorder %s14, 1
    %p79 = scmp.ne.s32.totalorder %s74, %s76
    %p80 = scmp.eq.s32.totalorder %s14, 0
    %p81 = por %p79, %p80
    %p82 = scmp.ne.s32.totalorder %s74, %s76
    %p83 = scmp.eq.s32.totalorder %s19, 1
    %p84 = por %p82, %p83
    %p85 = scmp.ne.s32.totalorder %s76, %s77
    %p86 = scmp.eq.s32.totalorder %s19, 0
    %p87 = por %p85, %p86
    %p88 = scmp.ne.s32.totalorder %s76, %s77
    %p89 = scmp.eq.s32.totalorder %s20, 1
    %p90 = por %p88, %p89
    %p92 = scmp.ne.s32.totalorder %s77, %s91
    %p93 = scmp.eq.s32.totalorder %s20, 0
    %p94 = por %p92, %p93
    %s96 = sadd.s32 %s95, 1
    %p99 = scmp.eq.s32.totalorder %s14, 1
    %p100 = scmp.ne.s32.totalorder %s95, %s97
    %p101 = scmp.eq.s32.totalorder %s14, 0
    %p102 = por %p100, %p101
    %p103 = scmp.ne.s32.totalorder %s95, %s97
    %p104 = scmp.eq.s32.totalorder %s19, 1
    %p105 = por %p103, %p104
    %p106 = scmp.ne.s32.totalorder %s97, %s98
    %p107 = scmp.eq.s32.totalorder %s19, 0
    %p108 = por %p106, %p107
    %p109 = scmp.ne.s32.totalorder %s97, %s98
    %p110 = scmp.eq.s32.totalorder %s20, 1
    %p111 = por %p109, %p110
    %p113 = scmp.ne.s32.totalorder %s98, %s112
    %p114 = scmp.eq.s32.totalorder %s20, 0
    %p115 = por %p113, %p114
    %s117 = sadd.s32 %s116, 1
    %p120 = scmp.eq.s32.totalorder %s14, 1
    %p121 = scmp.ne.s32.totalorder %s116, %s118
    %p122 = scmp.eq.s32.totalorder %s14, 0
    %p123 = por %p121, %p122
    %p124 = scmp.ne.s32.totalorder %s116, %s118
    %p125 = scmp.eq.s32.totalorder %s19, 1
    %p126 = por %p124, %p125
    %p127 = scmp.ne.s32.totalorder %s118, %s119
    %p128 = scmp.eq.s32.totalorder %s19, 0
    %p129 = por %p127, %p128
    %p130 = scmp.ne.s32.totalorder %s118, %s119
    %p131 = scmp.eq.s32.totalorder %s20, 1
    %p132 = por %p130, %p131
    %p134 = scmp.ne.s32.totalorder %s119, %s133
    %p135 = scmp.eq.s32.totalorder %s20, 0
    %p136 = por %p134, %p135
    %s138 = sadd.s32 %s137, 1
    %p141 = scmp.eq.s32.totalorder %s14, 1
    %p142 = scmp.ne.s32.totalorder %s137, %s139
    %p143 = scmp.eq.s32.totalorder %s14, 0
    %p144 = por %p142, %p143
    %p145 = scmp.ne.s32.totalorder %s137, %s139
    %p146 = scmp.eq.s32.totalorder %s19, 1
    %p147 = por %p145, %p146
    %p148 = scmp.ne.s32.totalorder %s139, %s140
    %p149 = scmp.eq.s32.totalorder %s19, 0
    %p150 = por %p148, %p149
    %p151 = scmp.ne.s32.totalorder %s139, %s140
    %p152 = scmp.eq.s32.totalorder %s20, 1
    %p153 = por %p151, %p152
    %p155 = scmp.ne.s32.totalorder %s140, %s154
    %p156 = scmp.eq.s32.totalorder %s20, 0
    %p157 = por %p155, %p156
    %s159 = sadd.s32 %s158, 1
    %p162 = scmp.eq.s32.totalorder %s14, 1
    %p163 = scmp.ne.s32.totalorder %s158, %s160
    %p164 = scmp.eq.s32.totalorder %s14, 0
    %p165 = por %p163, %p164
    %p166 = scmp.ne.s32.totalorder %s158, %s160
    %p167 = scmp.eq.s32.totalorder %s19, 1
    %p168 = por %p166, %p167
    %p169 = scmp.ne.s32.totalorder %s160, %s161
    %p170 = scmp.eq.s32.totalorder %s19, 0
    %p171 = por %p169, %p170
    %p172 = scmp.ne.s32.totalorder %s160, %s161
    %p173 = scmp.eq.s32.totalorder %s20, 1
    %p174 = por %p172, %p173
    %p176 = scmp.ne.s32.totalorder %s161, %s175
    %p177 = scmp.eq.s32.totalorder %s20, 0
    %p178 = por %p176, %p177
    %s180 = sadd.s32 %s179, 1
    %p183 = scmp.eq.s32.totalorder %s14, 1
    %p184 = scmp.ne.s32.totalorder %s179, %s181
    %p185 = scmp.eq.s32.totalorder %s14, 0
    %p186 = por %p184, %p185
    %p187 = scmp.ne.s32.totalorder %s179, %s181
    %p188 = scmp.eq.s32.totalorder %s19, 1
    %p189 = por %p187, %p188
    %p190 = scmp.ne.s32.totalorder %s181, %s182
    %p191 = scmp.eq.s32.totalorder %s19, 0
    %p192 = por %p190, %p191
    %p193 = scmp.ne.s32.totalorder %s181, %s182
    %p194 = scmp.eq.s32.totalorder %s20, 1
    %p195 = por %p193, %p194
    %p197 = scmp.ne.s32.totalorder %s182, %s196
    %p198 = scmp.eq.s32.totalorder %s20, 0
    %p199 = por %p197, %p198
    %s200 = ssub.s32 %s14, %s21
    %p201 = scmp.eq.s32.totalorder %s200, 0
    %s203 = sadd.s32 %s202, 1
    %s204 = scalar_select %p201, %s202, %s203
    %p207 = pneg %p201
    %p208 = scmp.eq.s32.totalorder %s14, 1
    %p209 = por %p207, %p208
    %p210 = scmp.ne.s32.totalorder %s202, %s205
    %p211 = scmp.eq.s32.totalorder %s14, 0
    %p212 = por %p210, %p211
    %p213 = scmp.ne.s32.totalorder %s202, %s205
    %p214 = scmp.eq.s32.totalorder %s19, 1
    %p215 = por %p213, %p214
    %p216 = scmp.ne.s32.totalorder %s205, %s206
    %p217 = scmp.eq.s32.totalorder %s19, 0
    %p218 = por %p216, %p217
    %p219 = scmp.ne.s32.totalorder %s205, %s206
    %p220 = scmp.eq.s32.totalorder %s20, 1
    %p221 = por %p219, %p220
    %p223 = scmp.ne.s32.totalorder %s206, %s222
    %p224 = scmp.eq.s32.totalorder %s20, 0
    %p225 = por %p223, %p224
    %p226 = scmp.le.s32.totalorder 1, %s14
    %p227 = scmp.lt.s32.totalorder %s14, 3
    %p228 = pnand %p226, %p227
    %p229 = pneg %p228
    // Predicated region
    $region9: #{tpu_custom_call.1} parent=5 // pred_check
      _
    $region10: #{tpu_custom_call.1} parent=5 // pred_check_branch
      %231 = sbr.rel (%p228) target = $region12
    $region11: #{tpu_custom_call.1} parent=5 // pred_region
      %s232 = ssub.s32 %s14, 1
      // Predicated region
      $region13: #{tpu_custom_call.1} parent=11 // pred_check
        %p233 = pneg %p87
      $region14: #{tpu_custom_call.1} parent=11 // pred_check_branch
        %235 = sbr.rel (%p233) target = $region16
      $region15: #{tpu_custom_call.1} parent=11 // pred_region
        _
      $region16: #{tpu_custom_call.1} parent=11 // pred_fallthru
        _
      // Predicated region
      $region17: #{tpu_custom_call.1} parent=11 // pred_check
        %p236 = pneg %p108
      $region18: #{tpu_custom_call.1} parent=11 // pred_check_branch
        %238 = sbr.rel (%p236) target = $region20
      $region19: #{tpu_custom_call.1} parent=11 // pred_region
        _
      $region20: #{tpu_custom_call.1} parent=11 // pred_fallthru
        _
      // Predicated region
      $region21: #{tpu_custom_call.1} parent=11 // pred_check
        %p239 = pneg %p129
      $region22: #{tpu_custom_call.1} parent=11 // pred_check_branch
        %241 = sbr.rel (%p239) target = $region24
      $region23: #{tpu_custom_call.1} parent=11 // pred_region
        _
      $region24: #{tpu_custom_call.1} parent=11 // pred_fallthru
        _
      // Predicated region
      $region25: #{tpu_custom_call.1} parent=11 // pred_check
        %p242 = pneg %p150
      $region26: #{tpu_custom_call.1} parent=11 // pred_check_branch
        %244 = sbr.rel (%p242) target = $region28
      $region27: #{tpu_custom_call.1} parent=11 // pred_region
        _
      $region28: #{tpu_custom_call.1} parent=11 // pred_fallthru
        _
      // Predicated region
      $region29: #{tpu_custom_call.1} parent=11 // pred_check
        %p245 = pneg %p171
      $region30: #{tpu_custom_call.1} parent=11 // pred_check_branch
        %247 = sbr.rel (%p245) target = $region32
      $region31: #{tpu_custom_call.1} parent=11 // pred_region
        _
      $region32: #{tpu_custom_call.1} parent=11 // pred_fallthru
        _
      // Predicated region
      $region33: #{tpu_custom_call.1} parent=11 // pred_check
        %p248 = pneg %p192
      $region34: #{tpu_custom_call.1} parent=11 // pred_check_branch
        %250 = sbr.rel (%p248) target = $region36
      $region35: #{tpu_custom_call.1} parent=11 // pred_region
        _
      $region36: #{tpu_custom_call.1} parent=11 // pred_fallthru
        _
    $region12: #{tpu_custom_call.1} parent=5 // pred_fallthru
      _
    %p251 = scmp.lt.s32.totalorder %s14, 2
    // Predicated region
    $region37: #{tpu_custom_call.1} parent=5 // pred_check
      %p252 = pneg %p251
    $region38: #{tpu_custom_call.1} parent=5 // pred_check_branch
      %254 = sbr.rel (%p252) target = $region40
    $region39: #{tpu_custom_call.1} parent=5 // pred_region
      // Predicated region
      $region41: #{tpu_custom_call.1} parent=39 // pred_check
        %p255 = pneg %p34
      $region42: #{tpu_custom_call.1} parent=39 // pred_check_branch
        %257 = sbr.rel (%p255) target = $region44
      $region43: #{tpu_custom_call.1} parent=39 // pred_region
        %p258 = scmp.lt.s32.totalorder %s14, 1
        %s259 = scalar_select %p258, %s14, 1
        %s260 = smul.addr %s259, 8
        %s261 = smul.addr %s260, 8
        %s262 = scalar_lea.vmem %s0, %s261
      $region44: #{tpu_custom_call.1} parent=39 // pred_fallthru
        _
      // Predicated region
      $region45: #{tpu_custom_call.1} parent=39 // pred_check
        %p263 = pneg %p60
      $region46: #{tpu_custom_call.1} parent=39 // pred_check_branch
        %265 = sbr.rel (%p263) target = $region48
      $region47: #{tpu_custom_call.1} parent=39 // pred_region
        %p266 = scmp.lt.s32.totalorder %s14, 1
        %s267 = scalar_select %p266, %s14, 1
        %s268 = smul.addr %s267, 16
        %s269 = smul.addr %s268, 8
        %s270 = scalar_lea.vmem %s1, %s269
      $region48: #{tpu_custom_call.1} parent=39 // pred_fallthru
        _
    $region40: #{tpu_custom_call.1} parent=5 // pred_fallthru
      _
    %p271 = scmp.le.s32.totalorder 1, %s14
    %p272 = scmp.lt.s32.totalorder %s14, 3
    %p273 = pnand %p271, %p272
    %p274 = pneg %p273
    // Predicated region
    $region49: #{tpu_custom_call.1} parent=5 // pred_check
      _
    $region50: #{tpu_custom_call.1} parent=5 // pred_check_branch
      %276 = sbr.rel (%p273) target = $region52
    $region51: #{tpu_custom_call.1} parent=5 // pred_region
      %s277 = ssub.s32 %s14, 1
      %p278 = scmp.lt.s32.totalorder %s19, 1
      %s279 = scalar_select %p278, %s19, 1
      %s280 = smul.addr %s279, 8
      %s281 = smul.addr %s280, 8
      %s282 = scalar_lea.vmem %s0, %s281
      %p283 = pneg %p40
      %p284 = pneg %p37
      %p285 = scmp.lt.s32.totalorder %s19, 1
      %s286 = scalar_select %p285, %s19, 1
      %s287 = smul.addr %s286, 16
      %s288 = smul.addr %s287, 8
      %s289 = scalar_lea.vmem %s1, %s288
      %p290 = pneg %p66
      %p291 = pneg %p63
      %p292 = pneg %p87
      %p293 = pneg %p84
      %p294 = pneg %p108
      %p295 = pneg %p105
      %p296 = pneg %p129
      %p297 = pneg %p126
      %p298 = pneg %p150
      %p299 = pneg %p147
      %p300 = pneg %p171
      %p301 = pneg %p168
      %p302 = pneg %p192
      %p303 = pneg %p189
      %p304 = pneg %p218
      %p305 = pneg %p215
      %p306 = scmp.lt.s32.totalorder %s19, 1
      %s307 = scalar_select %p306, %s19, 1
      %s308 = smul.addr %s307, 16
      %s309 = smul.addr %s308, 8
      %s310 = scalar_lea.vmem %s8, %s309
      %p311 = scmp.lt.s32.totalorder %s19, 1
      %s312 = scalar_select %p311, %s19, 1
      %s313 = smul.addr %s312, 8
      %s314 = smul.addr %s313, 8
      %s315 = scalar_lea.vmem %s0, %s314
      %p316 = scmp.lt.s32.totalorder %s19, 1
      %s317 = scalar_select %p316, %s19, 1
      %s318 = smul.addr %s317, 16
      %s319 = smul.addr %s318, 8
      %s320 = scalar_lea.vmem %s1, %s319
      %p321 = scmp.lt.s32.totalorder %s19, 1
      %s322 = scalar_select %p321, %s19, 1
      %s323 = smul.addr %s322, 16
      %s324 = smul.addr %s323, 8
      %s325 = scalar_lea.vmem %s8, %s324
      %vm327 = vcmask 130048
      %328 = vst.msk [vmem:[#allocation2] sm:$0xff] %vm327, 0.0
      %vm329 = vcmask 122880
      %330 = vst.msk [vmem:[#allocation2 + $0x8] sm:$0x1] %vm329, 0.0
      %s331 = scalar_lea.vmem [#allocation2], 272
      %332 = vst.msk [vmem:[%s331] sm:$0xff] %vm327, 0.0
      %333 = vst.msk [vmem:[%s331 + $0x8] sm:$0x1] %vm329, 0.0
      %334 = vst.msk [vmem:[#allocation2] sm:$0x1] %vm329, 0.0
      %335 = vst.msk [vmem:[#allocation2 + $0x10] sm:$0x1] %vm329, 0.0
      %336 = vst.msk [vmem:[#allocation2 + $0x20] sm:$0x1] %vm329, 0.0
      %337 = vst.msk [vmem:[#allocation2 + $0x30] sm:$0x1] %vm329, 0.0
      %338 = vst.msk [vmem:[#allocation2 + $0x40] sm:$0x1] %vm329, 0.0
      %339 = vst.msk [vmem:[#allocation2 + $0x50] sm:$0x1] %vm329, 0.0
      %340 = vst.msk [vmem:[#allocation2 + $0x60] sm:$0x1] %vm329, 0.0
      %341 = vst.msk [vmem:[#allocation2 + $0x70] sm:$0x1] %vm329, 0.0
      %342 = vst.msk [vmem:[#allocation2 + $0x80] sm:$0x1] %vm329, 0.0
      %343 = vst.msk [vmem:[#allocation2 + $0x90] sm:$0x1] %vm329, 0.0
      %344 = vst.msk [vmem:[#allocation2 + $0xa0] sm:$0x1] %vm329, 0.0
      %345 = vst.msk [vmem:[#allocation2 + $0xb0] sm:$0x1] %vm329, 0.0
      %346 = vst.msk [vmem:[#allocation2 + $0xc0] sm:$0x1] %vm329, 0.0
      %347 = vst.msk [vmem:[#allocation2 + $0xd0] sm:$0x1] %vm329, 0.0
      %348 = vst.msk [vmem:[#allocation2 + $0xe0] sm:$0x1] %vm329, 0.0
      %349 = vst.msk [vmem:[#allocation2 + $0xf0] sm:$0x1] %vm329, 0.0
      %350 = vst.msk [vmem:[#allocation2 + $0x100] sm:$0x1] %vm329, 0.0
      %351 = vst.msk [vmem:[#allocation2 + $0x110] sm:$0x1] %vm329, 0.0
      %352 = vst.msk [vmem:[#allocation2 + $0x8] sm:$0x1] %vm329, 0.0
      %353 = vst.msk [vmem:[#allocation2 + $0x18] sm:$0x1] %vm329, 0.0
      %354 = vst.msk [vmem:[#allocation2 + $0x28] sm:$0x1] %vm329, 0.0
      %355 = vst.msk [vmem:[#allocation2 + $0x38] sm:$0x1] %vm329, 0.0
      %356 = vst.msk [vmem:[#allocation2 + $0x48] sm:$0x1] %vm329, 0.0
      %357 = vst.msk [vmem:[#allocation2 + $0x58] sm:$0x1] %vm329, 0.0
      %358 = vst.msk [vmem:[#allocation2 + $0x68] sm:$0x1] %vm329, 0.0
      %359 = vst.msk [vmem:[#allocation2 + $0x78] sm:$0x1] %vm329, 0.0
      %360 = vst.msk [vmem:[#allocation2 + $0x88] sm:$0x1] %vm329, 0.0
      %361 = vst.msk [vmem:[#allocation2 + $0x98] sm:$0x1] %vm329, 0.0
      %362 = vst.msk [vmem:[#allocation2 + $0xa8] sm:$0x1] %vm329, 0.0
      %363 = vst.msk [vmem:[#allocation2 + $0xb8] sm:$0x1] %vm329, 0.0
      %364 = vst.msk [vmem:[#allocation2 + $0xc8] sm:$0x1] %vm329, 0.0
      %365 = vst.msk [vmem:[#allocation2 + $0xd8] sm:$0x1] %vm329, 0.0
      %366 = vst.msk [vmem:[#allocation2 + $0xe8] sm:$0x1] %vm329, 0.0
      %367 = vst.msk [vmem:[#allocation2 + $0xf8] sm:$0x1] %vm329, 0.0
      %368 = vst.msk [vmem:[#allocation2 + $0x108] sm:$0x1] %vm329, 0.0
      %369 = vst.msk [vmem:[#allocation2 + $0x118] sm:$0x1] %vm329, 0.0
      %370 = vst.msk [vmem:[#allocation3] sm:$0xff] %vm327, 0.0
      %371 = vst.msk [vmem:[#allocation3 + $0x8] sm:$0x1] %vm329, 0.0
      %s372 = scalar_lea.vmem [#allocation3], 272
      %373 = vst.msk [vmem:[%s372] sm:$0xff] %vm327, 0.0
      %374 = vst.msk [vmem:[%s372 + $0x8] sm:$0x1] %vm329, 0.0
      %375 = vst.msk [vmem:[#allocation3] sm:$0x1] %vm329, 0.0
      %376 = vst.msk [vmem:[#allocation3 + $0x10] sm:$0x1] %vm329, 0.0
      %377 = vst.msk [vmem:[#allocation3 + $0x20] sm:$0x1] %vm329, 0.0
      %378 = vst.msk [vmem:[#allocation3 + $0x30] sm:$0x1] %vm329, 0.0
      %379 = vst.msk [vmem:[#allocation3 + $0x40] sm:$0x1] %vm329, 0.0
      %380 = vst.msk [vmem:[#allocation3 + $0x50] sm:$0x1] %vm329, 0.0
      %381 = vst.msk [vmem:[#allocation3 + $0x60] sm:$0x1] %vm329, 0.0
      %382 = vst.msk [vmem:[#allocation3 + $0x70] sm:$0x1] %vm329, 0.0
      %383 = vst.msk [vmem:[#allocation3 + $0x80] sm:$0x1] %vm329, 0.0
      %384 = vst.msk [vmem:[#allocation3 + $0x90] sm:$0x1] %vm329, 0.0
      %385 = vst.msk [vmem:[#allocation3 + $0xa0] sm:$0x1] %vm329, 0.0
      %386 = vst.msk [vmem:[#allocation3 + $0xb0] sm:$0x1] %vm329, 0.0
      %387 = vst.msk [vmem:[#allocation3 + $0xc0] sm:$0x1] %vm329, 0.0
      %388 = vst.msk [vmem:[#allocation3 + $0xd0] sm:$0x1] %vm329, 0.0
      %389 = vst.msk [vmem:[#allocation3 + $0xe0] sm:$0x1] %vm329, 0.0
      %390 = vst.msk [vmem:[#allocation3 + $0xf0] sm:$0x1] %vm329, 0.0
      %391 = vst.msk [vmem:[#allocation3 + $0x100] sm:$0x1] %vm329, 0.0
      %392 = vst.msk [vmem:[#allocation3 + $0x110] sm:$0x1] %vm329, 0.0
      %393 = vst.msk [vmem:[#allocation3 + $0x8] sm:$0x1] %vm329, 0.0
      %394 = vst.msk [vmem:[#allocation3 + $0x18] sm:$0x1] %vm329, 0.0
      %395 = vst.msk [vmem:[#allocation3 + $0x28] sm:$0x1] %vm329, 0.0
      %396 = vst.msk [vmem:[#allocation3 + $0x38] sm:$0x1] %vm329, 0.0
      %397 = vst.msk [vmem:[#allocation3 + $0x48] sm:$0x1] %vm329, 0.0
      %398 = vst.msk [vmem:[#allocation3 + $0x58] sm:$0x1] %vm329, 0.0
      %399 = vst.msk [vmem:[#allocation3 + $0x68] sm:$0x1] %vm329, 0.0
      %400 = vst.msk [vmem:[#allocation3 + $0x78] sm:$0x1] %vm329, 0.0
      %401 = vst.msk [vmem:[#allocation3 + $0x88] sm:$0x1] %vm329, 0.0
      %402 = vst.msk [vmem:[#allocation3 + $0x98] sm:$0x1] %vm329, 0.0
      %403 = vst.msk [vmem:[#allocation3 + $0xa8] sm:$0x1] %vm329, 0.0
      %404 = vst.msk [vmem:[#allocation3 + $0xb8] sm:$0x1] %vm329, 0.0
      %405 = vst.msk [vmem:[#allocation3 + $0xc8] sm:$0x1] %vm329, 0.0
      %406 = vst.msk [vmem:[#allocation3 + $0xd8] sm:$0x1] %vm329, 0.0
      %407 = vst.msk [vmem:[#allocation3 + $0xe8] sm:$0x1] %vm329, 0.0
      %408 = vst.msk [vmem:[#allocation3 + $0xf8] sm:$0x1] %vm329, 0.0
      %409 = vst.msk [vmem:[#allocation3 + $0x108] sm:$0x1] %vm329, 0.0
      %410 = vst.msk [vmem:[#allocation3 + $0x118] sm:$0x1] %vm329, 0.0
      %v411 = vld [vmem:[%s315] sm:$0xff]
      %v412 = vld [vmem:[%s315 + $0x8] sm:$0xff]
      %v413 = vld [vmem:[%s315 + $0x10] sm:$0xff]
      %v414 = vld [vmem:[%s315 + $0x18] sm:$0xff]
      %v415 = vld [vmem:[%s315 + $0x20] sm:$0xff]
      %v416 = vld [vmem:[%s315 + $0x28] sm:$0xff]
      %v417 = vld [vmem:[%s315 + $0x30] sm:$0xff]
      %v418 = vld [vmem:[%s315 + $0x38] sm:$0xff]
      %v419 = vpack.c.bf16 %v412, %v411
      %v420 = vpack.c.bf16 %v414, %v413
      %v421 = vpack.c.bf16 %v416, %v415
      %v422 = vpack.c.bf16 %v418, %v417
      %v423 = vld [vmem:[%s2] sm:$0xf]
      %v424 = vld [vmem:[%s3] sm:$0x1]
      %v426 = vlaneseq
      %v427 = vshrl.u32 %v426, 7
      %v428 = vsub.s32 0, %v427
      %v429 = vrot.slane %v424, %v428
      %vm431 = vcmask 64512
      %v433 = vsel %vm431, %v419, 0
      %v436 = vsel %vm431, %v420, 0
      %v439 = vsel %vm431, %v421, 0
      %v442 = vsel %vm431, %v422, 0
      %vm444 = vcmask 1043456
      %v446 = vsel %vm444, %v423, 0
      %448 = vmatprep.subr.bf16.mxu0 0
      %449 = vmatpush1.bf16.msra.mxu0 %v446
      %450 = vmatprep.subr.bf16.mxu0 0
      %451 = vmatpush1.bf16.msra.mxu0 0
      %452 = vmatprep.subr.bf16.mxu0 0
      %453 = vmatpush1.bf16.msra.mxu0 0
      %454 = vmatprep.subr.bf16.mxu0 0
      %455 = vmatpush1.bf16.msra.mxu0 0
      %456 = vmatprep.subr.bf16.mxu0 0
      %457 = vmatpush1.bf16.msra.mxu0 0
      %458 = vmatprep.subr.bf16.mxu0 0
      %459 = vmatpush1.bf16.msra.mxu0 0
      %460 = vmatprep.subr.bf16.mxu0 0
      %461 = vmatpush1.bf16.msra.mxu0 0
      %462 = vmatprep.subr.bf16.mxu0 0
      %463 = vmatpush1.bf16.msra.mxu0 0
      %464 = vmatprep.subr.bf16.mxu0 0
      %465 = vmatpush1.bf16.msra.mxu0 0
      %466 = vmatprep.subr.bf16.mxu0 0
      %467 = vmatpush1.bf16.msra.mxu0 0
      %468 = vmatprep.subr.bf16.mxu0 0
      %469 = vmatpush1.bf16.msra.mxu0 0
      %470 = vmatprep.subr.bf16.mxu0 0
      %471 = vmatpush1.bf16.msra.mxu0 0
      %472 = vmatprep.subr.bf16.mxu0 0
      %473 = vmatpush1.bf16.msra.mxu0 0
      %474 = vmatprep.subr.bf16.mxu0 0
      %475 = vmatpush1.bf16.msra.mxu0 0
      %476 = vmatprep.subr.bf16.mxu0 0
      %477 = vmatpush1.bf16.msra.mxu0 0
      %478 = vmatprep.subr.bf16.mxu0 0
      %479 = vmatpush1.bf16.msra.mxu0 0
      %480 = vmatprep.mubr.bf16.mxu0 0
      %481 = vmatmul.mubr.bf16.gmra.mrb[0].mxu0 %v433
      %v482 = vpop.f32.mrb[0].mxu0
      %v483 = vadd.f32 %v429, %v482
      %v484 = vpop.f32.mrb[0].mxu0
      %v485 = vpop.f32.mrb[0].mxu0
      %v486 = vadd.f32 %v429, %v485
      %v487 = vpop.f32.mrb[0].mxu0
      %488 = vmatprep.mubr.bf16.mxu0 0
      %489 = vmatmul.mubr.bf16.gmra.mrb[0].mxu0 %v436
      %v490 = vpop.f32.mrb[0].mxu0
      %v491 = vadd.f32 %v429, %v490
      %v492 = vpop.f32.mrb[0].mxu0
      %v493 = vpop.f32.mrb[0].mxu0
      %v494 = vadd.f32 %v429, %v493
      %v495 = vpop.f32.mrb[0].mxu0
      %496 = vmatprep.mubr.bf16.mxu0 0
      %497 = vmatmul.mubr.bf16.gmra.mrb[0].mxu0 %v439
      %v498 = vpop.f32.mrb[0].mxu0
      %v499 = vadd.f32 %v429, %v498
      %v500 = vpop.f32.mrb[0].mxu0
      %v501 = vpop.f32.mrb[0].mxu0
      %v502 = vadd.f32 %v429, %v501
      %v503 = vpop.f32.mrb[0].mxu0
      %504 = vmatprep.mubr.bf16.mxu0 0
      %505 = vmatmul.mubr.bf16.gmra.mrb[0].mxu0 %v442
      %v506 = vpop.f32.mrb[0].mxu0
      %v507 = vadd.f32 %v429, %v506
      %v508 = vpop.f32.mrb[0].mxu0
      %v509 = vpop.f32.mrb[0].mxu0
      %v510 = vadd.f32 %v429, %v509
      %v511 = vpop.f32.mrb[0].mxu0
      %512 = vdwg.mxu0
      %521 = vrot.lane.b32.xlu0 %v483, 120
      %v522 = vpop.permute.xlu0 %521
      %523 = vrot.lane.b32.xlu0 %v486, 120
      %v524 = vpop.permute.xlu0 %523
      %525 = vrot.lane.b32.xlu0 %v491, 120
      %v526 = vpop.permute.xlu0 %525
      %527 = vrot.lane.b32.xlu0 %v494, 120
      %v528 = vpop.permute.xlu0 %527
      %529 = vrot.lane.b32.xlu0 %v499, 120
      %v530 = vpop.permute.xlu0 %529
      %531 = vrot.lane.b32.xlu0 %v502, 120
      %v532 = vpop.permute.xlu0 %531
      %533 = vrot.lane.b32.xlu0 %v507, 120
      %v534 = vpop.permute.xlu0 %533
      %535 = vrot.lane.b32.xlu0 %v510, 120
      %v536 = vpop.permute.xlu0 %535
      %v545 = vld [vmem:[%s320] sm:$0xff]
      %v546 = vld [vmem:[%s320 + $0x8] sm:$0xff]
      %v547 = vld [vmem:[%s320 + $0x10] sm:$0xff]
      %v548 = vld [vmem:[%s320 + $0x18] sm:$0xff]
      %v549 = vld [vmem:[%s320 + $0x20] sm:$0xff]
      %v550 = vld [vmem:[%s320 + $0x28] sm:$0xff]
      %v551 = vld [vmem:[%s320 + $0x30] sm:$0xff]
      %v552 = vld [vmem:[%s320 + $0x38] sm:$0xff]
      %v553 = vld [vmem:[%s320 + $0x40] sm:$0xff]
      %v554 = vld [vmem:[%s320 + $0x48] sm:$0xff]
      %v555 = vld [vmem:[%s320 + $0x50] sm:$0xff]
      %v556 = vld [vmem:[%s320 + $0x58] sm:$0xff]
      %v557 = vld [vmem:[%s320 + $0x60] sm:$0xff]
      %v558 = vld [vmem:[%s320 + $0x68] sm:$0xff]
      %v559 = vld [vmem:[%s320 + $0x70] sm:$0xff]
      %v560 = vld [vmem:[%s320 + $0x78] sm:$0xff]
      %577 = vrot.lane.b32.xlu0 %v545, 4
      %v578 = vpop.permute.xlu0 %577
      %579 = vrot.lane.b32.xlu0 %v546, 4
      %v580 = vpop.permute.xlu0 %579
      %581 = vrot.lane.b32.xlu0 %v547, 4
      %v582 = vpop.permute.xlu0 %581
      %583 = vrot.lane.b32.xlu0 %v548, 4
      %v584 = vpop.permute.xlu0 %583
      %585 = vrot.lane.b32.xlu0 %v549, 4
      %v586 = vpop.permute.xlu0 %585
      %587 = vrot.lane.b32.xlu0 %v550, 4
      %v588 = vpop.permute.xlu0 %587
      %589 = vrot.lane.b32.xlu0 %v551, 4
      %v590 = vpop.permute.xlu0 %589
      %591 = vrot.lane.b32.xlu0 %v552, 4
      %v592 = vpop.permute.xlu0 %591
      %593 = vrot.lane.b32.xlu0 %v553, 4
      %v594 = vpop.permute.xlu0 %593
      %595 = vrot.lane.b32.xlu0 %v554, 4
      %v596 = vpop.permute.xlu0 %595
      %597 = vrot.lane.b32.xlu0 %v555, 4
      %v598 = vpop.permute.xlu0 %597
      %599 = vrot.lane.b32.xlu0 %v556, 4
      %v600 = vpop.permute.xlu0 %599
      %601 = vrot.lane.b32.xlu0 %v557, 4
      %v602 = vpop.permute.xlu0 %601
      %603 = vrot.lane.b32.xlu0 %v558, 4
      %v604 = vpop.permute.xlu0 %603
      %605 = vrot.lane.b32.xlu0 %v559, 4
      %v606 = vpop.permute.xlu0 %605
      %607 = vrot.lane.b32.xlu0 %v560, 4
      %v608 = vpop.permute.xlu0 %607
      %vm625 = vcmask 31744
      %v626 = vsel %vm625, %v483, %v578
      %v627 = vsel %vm625, %v522, %v580
      %v628 = vsel %vm625, %v486, %v582
      %v629 = vsel %vm625, %v524, %v584
      %v630 = vsel %vm625, %v491, %v586
      %v631 = vsel %vm625, %v526, %v588
      %v632 = vsel %vm625, %v494, %v590
      %v633 = vsel %vm625, %v528, %v592
      %v634 = vsel %vm625, %v499, %v594
      %v635 = vsel %vm625, %v530, %v596
      %v636 = vsel %vm625, %v502, %v598
      %v637 = vsel %vm625, %v532, %v600
      %v638 = vsel %vm625, %v507, %v602
      %v639 = vsel %vm625, %v534, %v604
      %v640 = vsel %vm625, %v510, %v606
      %v641 = vsel %vm625, %v536, %v608
      %642 = vrot.lane.b32.xlu0 %v483, 124
      %v643 = vpop.permute.xlu0 %642
      %644 = vrot.lane.b32.xlu0 %v522, 124
      %v645 = vpop.permute.xlu0 %644
      %646 = vrot.lane.b32.xlu0 %v486, 124
      %v647 = vpop.permute.xlu0 %646
      %648 = vrot.lane.b32.xlu0 %v524, 124
      %v649 = vpop.permute.xlu0 %648
      %650 = vrot.lane.b32.xlu0 %v491, 124
      %v651 = vpop.permute.xlu0 %650
      %652 = vrot.lane.b32.xlu0 %v526, 124
      %v653 = vpop.permute.xlu0 %652
      %654 = vrot.lane.b32.xlu0 %v494, 124
      %v655 = vpop.permute.xlu0 %654
      %656 = vrot.lane.b32.xlu0 %v528, 124
      %v657 = vpop.permute.xlu0 %656
      %658 = vrot.lane.b32.xlu0 %v499, 124
      %v659 = vpop.permute.xlu0 %658
      %660 = vrot.lane.b32.xlu0 %v530, 124
      %v661 = vpop.permute.xlu0 %660
      %662 = vrot.lane.b32.xlu0 %v502, 124
      %v663 = vpop.permute.xlu0 %662
      %664 = vrot.lane.b32.xlu0 %v532, 124
      %v665 = vpop.permute.xlu0 %664
      %666 = vrot.lane.b32.xlu0 %v507, 124
      %v667 = vpop.permute.xlu0 %666
      %668 = vrot.lane.b32.xlu0 %v534, 124
      %v669 = vpop.permute.xlu0 %668
      %670 = vrot.lane.b32.xlu0 %v510, 124
      %v671 = vpop.permute.xlu0 %670
      %672 = vrot.lane.b32.xlu0 %v536, 124
      %v673 = vpop.permute.xlu0 %672
      %v690 = vsel %vm625, %v643, %v545
      %v691 = vsel %vm625, %v645, %v546
      %v692 = vsel %vm625, %v647, %v547
      %v693 = vsel %vm625, %v649, %v548
      %v694 = vsel %vm625, %v651, %v549
      %v695 = vsel %vm625, %v653, %v550
      %v696 = vsel %vm625, %v655, %v551
      %v697 = vsel %vm625, %v657, %v552
      %v698 = vsel %vm625, %v659, %v553
      %v699 = vsel %vm625, %v661, %v554
      %v700 = vsel %vm625, %v663, %v555
      %v701 = vsel %vm625, %v665, %v556
      %v702 = vsel %vm625, %v667, %v557
      %v703 = vsel %vm625, %v669, %v558
      %v704 = vsel %vm625, %v671, %v559
      %v705 = vsel %vm625, %v673, %v560
      %s706 = scalar_lea.vmem [#allocation2], 16
      %707 = vst.msk [vmem:[%s706 + $0x1] sm:$0xff] %vm431, %v690
      %708 = vst.msk [vmem:[%s706 + $0x11] sm:$0xff] %vm431, %v691
      %709 = vst.msk [vmem:[%s706 + $0x21] sm:$0xff] %vm431, %v692
      %710 = vst.msk [vmem:[%s706 + $0x31] sm:$0xff] %vm431, %v693
      %711 = vst.msk [vmem:[%s706 + $0x41] sm:$0xff] %vm431, %v694
      %712 = vst.msk [vmem:[%s706 + $0x51] sm:$0xff] %vm431, %v695
      %713 = vst.msk [vmem:[%s706 + $0x61] sm:$0xff] %vm431, %v696
      %714 = vst.msk [vmem:[%s706 + $0x71] sm:$0xff] %vm431, %v697
      %715 = vst.msk [vmem:[%s706 + $0x81] sm:$0xff] %vm431, %v698
      %716 = vst.msk [vmem:[%s706 + $0x91] sm:$0xff] %vm431, %v699
      %717 = vst.msk [vmem:[%s706 + $0xa1] sm:$0xff] %vm431, %v700
      %718 = vst.msk [vmem:[%s706 + $0xb1] sm:$0xff] %vm431, %v701
      %719 = vst.msk [vmem:[%s706 + $0xc1] sm:$0xff] %vm431, %v702
      %720 = vst.msk [vmem:[%s706 + $0xd1] sm:$0xff] %vm431, %v703
      %721 = vst.msk [vmem:[%s706 + $0xe1] sm:$0xff] %vm431, %v704
      %722 = vst.msk [vmem:[%s706 + $0xf1] sm:$0xff] %vm431, %v705
      %739 = vrot.lane.b32.xlu0 %v626, 8
      %v740 = vpop.permute.xlu0 %739
      %741 = vrot.lane.b32.xlu0 %v627, 8
      %v742 = vpop.permute.xlu0 %741
      %743 = vrot.lane.b32.xlu0 %v628, 8
      %v744 = vpop.permute.xlu0 %743
      %745 = vrot.lane.b32.xlu0 %v629, 8
      %v746 = vpop.permute.xlu0 %745
      %747 = vrot.lane.b32.xlu0 %v630, 8
      %v748 = vpop.permute.xlu0 %747
      %749 = vrot.lane.b32.xlu0 %v631, 8
      %v750 = vpop.permute.xlu0 %749
      %751 = vrot.lane.b32.xlu0 %v632, 8
      %v752 = vpop.permute.xlu0 %751
      %753 = vrot.lane.b32.xlu0 %v633, 8
      %v754 = vpop.permute.xlu0 %753
      %755 = vrot.lane.b32.xlu0 %v634, 8
      %v756 = vpop.permute.xlu0 %755
      %757 = vrot.lane.b32.xlu0 %v635, 8
      %v758 = vpop.permute.xlu0 %757
      %759 = vrot.lane.b32.xlu0 %v636, 8
      %v760 = vpop.permute.xlu0 %759
      %761 = vrot.lane.b32.xlu0 %v637, 8
      %v762 = vpop.permute.xlu0 %761
      %763 = vrot.lane.b32.xlu0 %v638, 8
      %v764 = vpop.permute.xlu0 %763
      %765 = vrot.lane.b32.xlu0 %v639, 8
      %v766 = vpop.permute.xlu0 %765
      %767 = vrot.lane.b32.xlu0 %v640, 8
      %v768 = vpop.permute.xlu0 %767
      %769 = vrot.lane.b32.xlu0 %v641, 8
      %v770 = vpop.permute.xlu0 %769
      %vm787 = vcmask 130112
      %788 = vst.msk [vmem:[%s706] sm:$0xff] %vm787, %v740
      %789 = vst.msk [vmem:[%s706 + $0x10] sm:$0xff] %vm787, %v742
      %790 = vst.msk [vmem:[%s706 + $0x20] sm:$0xff] %vm787, %v744
      %791 = vst.msk [vmem:[%s706 + $0x30] sm:$0xff] %vm787, %v746
      %792 = vst.msk [vmem:[%s706 + $0x40] sm:$0xff] %vm787, %v748
      %793 = vst.msk [vmem:[%s706 + $0x50] sm:$0xff] %vm787, %v750
      %794 = vst.msk [vmem:[%s706 + $0x60] sm:$0xff] %vm787, %v752
      %795 = vst.msk [vmem:[%s706 + $0x70] sm:$0xff] %vm787, %v754
      %796 = vst.msk [vmem:[%s706 + $0x80] sm:$0xff] %vm787, %v756
      %797 = vst.msk [vmem:[%s706 + $0x90] sm:$0xff] %vm787, %v758
      %798 = vst.msk [vmem:[%s706 + $0xa0] sm:$0xff] %vm787, %v760
      %799 = vst.msk [vmem:[%s706 + $0xb0] sm:$0xff] %vm787, %v762
      %800 = vst.msk [vmem:[%s706 + $0xc0] sm:$0xff] %vm787, %v764
      %801 = vst.msk [vmem:[%s706 + $0xd0] sm:$0xff] %vm787, %v766
      %802 = vst.msk [vmem:[%s706 + $0xe0] sm:$0xff] %vm787, %v768
      %803 = vst.msk [vmem:[%s706 + $0xf0] sm:$0xff] %vm787, %v770
      %v804 = vld [vmem:[#allocation2] sm:$0xff]
      %v805 = vld [vmem:[#allocation2 + $0x10] sm:$0xff]
      %v806 = vld [vmem:[#allocation2 + $0x20] sm:$0xff]
      %v807 = vld [vmem:[#allocation2 + $0x30] sm:$0xff]
      %v808 = vld [vmem:[#allocation2 + $0x40] sm:$0xff]
      %v809 = vld [vmem:[#allocation2 + $0x50] sm:$0xff]
      %v810 = vld [vmem:[#allocation2 + $0x60] sm:$0xff]
      %v811 = vld [vmem:[#allocation2 + $0x70] sm:$0xff]
      %v812 = vld [vmem:[#allocation2 + $0x80] sm:$0xff]
      %v813 = vld [vmem:[#allocation2 + $0x90] sm:$0xff]
      %v814 = vld [vmem:[#allocation2 + $0xa0] sm:$0xff]
      %v815 = vld [vmem:[#allocation2 + $0xb0] sm:$0xff]
      %v816 = vld [vmem:[#allocation2 + $0xc0] sm:$0xff]
      %v817 = vld [vmem:[#allocation2 + $0xd0] sm:$0xff]
      %v818 = vld [vmem:[#allocation2 + $0xe0] sm:$0xff]
      %v819 = vld [vmem:[#allocation2 + $0xf0] sm:$0xff]
      %v820 = vpack.c.bf16 %v804, %v804
      %v821 = vpack.c.bf16 %v805, %v805
      %v822 = vpack.c.bf16 %v806, %v806
      %v823 = vpack.c.bf16 %v807, %v807
      %v824 = vpack.c.bf16 %v808, %v808
      %v825 = vpack.c.bf16 %v809, %v809
      %v826 = vpack.c.bf16 %v810, %v810
      %v827 = vpack.c.bf16 %v811, %v811
      %v828 = vpack.c.bf16 %v812, %v812
      %v829 = vpack.c.bf16 %v813, %v813
      %v830 = vpack.c.bf16 %v814, %v814
      %v831 = vpack.c.bf16 %v815, %v815
      %v832 = vpack.c.bf16 %v816, %v816
      %v833 = vpack.c.bf16 %v817, %v817
      %v834 = vpack.c.bf16 %v818, %v818
      %v835 = vpack.c.bf16 %v819, %v819
      %v836 = vld [vmem:[#allocation2 + $0x1] sm:$0xff]
      %v837 = vld [vmem:[#allocation2 + $0x11] sm:$0xff]
      %v838 = vld [vmem:[#allocation2 + $0x21] sm:$0xff]
      %v839 = vld [vmem:[#allocation2 + $0x31] sm:$0xff]
      %v840 = vld [vmem:[#allocation2 + $0x41] sm:$0xff]
      %v841 = vld [vmem:[#allocation2 + $0x51] sm:$0xff]
      %v842 = vld [vmem:[#allocation2 + $0x61] sm:$0xff]
      %v843 = vld [vmem:[#allocation2 + $0x71] sm:$0xff]
      %v844 = vld [vmem:[#allocation2 + $0x81] sm:$0xff]
      %v845 = vld [vmem:[#allocation2 + $0x91] sm:$0xff]
      %v846 = vld [vmem:[#allocation2 + $0xa1] sm:$0xff]
      %v847 = vld [vmem:[#allocation2 + $0xb1] sm:$0xff]
      %v848 = vld [vmem:[#allocation2 + $0xc1] sm:$0xff]
      %v849 = vld [vmem:[#allocation2 + $0xd1] sm:$0xff]
      %v850 = vld [vmem:[#allocation2 + $0xe1] sm:$0xff]
      %v851 = vld [vmem:[#allocation2 + $0xf1] sm:$0xff]
      %v852 = vpack.c.bf16 %v836, %v836
      %v853 = vpack.c.bf16 %v837, %v837
      %v854 = vpack.c.bf16 %v838, %v838
      %v855 = vpack.c.bf16 %v839, %v839
      %v856 = vpack.c.bf16 %v840, %v840
      %v857 = vpack.c.bf16 %v841, %v841
      %v858 = vpack.c.bf16 %v842, %v842
      %v859 = vpack.c.bf16 %v843, %v843
      %v860 = vpack.c.bf16 %v844, %v844
      %v861 = vpack.c.bf16 %v845, %v845
      %v862 = vpack.c.bf16 %v846, %v846
      %v863 = vpack.c.bf16 %v847, %v847
      %v864 = vpack.c.bf16 %v848, %v848
      %v865 = vpack.c.bf16 %v849, %v849
      %v866 = vpack.c.bf16 %v850, %v850
      %v867 = vpack.c.bf16 %v851, %v851
      %v868 = vld [vmem:[%s706] sm:$0xff]
      %v869 = vld [vmem:[%s706 + $0x10] sm:$0xff]
      %v870 = vld [vmem:[%s706 + $0x20] sm:$0xff]
      %v871 = vld [vmem:[%s706 + $0x30] sm:$0xff]
      %v872 = vld [vmem:[%s706 + $0x40] sm:$0xff]
      %v873 = vld [vmem:[%s706 + $0x50] sm:$0xff]
      %v874 = vld [vmem:[%s706 + $0x60] sm:$0xff]
      %v875 = vld [vmem:[%s706 + $0x70] sm:$0xff]
      %v876 = vld [vmem:[%s706 + $0x80] sm:$0xff]
      %v877 = vld [vmem:[%s706 + $0x90] sm:$0xff]
      %v878 = vld [vmem:[%s706 + $0xa0] sm:$0xff]
      %v879 = vld [vmem:[%s706 + $0xb0] sm:$0xff]
      %v880 = vld [vmem:[%s706 + $0xc0] sm:$0xff]
      %v881 = vld [vmem:[%s706 + $0xd0] sm:$0xff]
      %v882 = vld [vmem:[%s706 + $0xe0] sm:$0xff]
      %v883 = vld [vmem:[%s706 + $0xf0] sm:$0xff]
      %v884 = vpack.c.bf16 %v868, %v868
      %v885 = vpack.c.bf16 %v869, %v869
      %v886 = vpack.c.bf16 %v870, %v870
      %v887 = vpack.c.bf16 %v871, %v871
      %v888 = vpack.c.bf16 %v872, %v872
      %v889 = vpack.c.bf16 %v873, %v873
      %v890 = vpack.c.bf16 %v874, %v874
      %v891 = vpack.c.bf16 %v875, %v875
      %v892 = vpack.c.bf16 %v876, %v876
      %v893 = vpack.c.bf16 %v877, %v877
      %v894 = vpack.c.bf16 %v878, %v878
      %v895 = vpack.c.bf16 %v879, %v879
      %v896 = vpack.c.bf16 %v880, %v880
      %v897 = vpack.c.bf16 %v881, %v881
      %v898 = vpack.c.bf16 %v882, %v882
      %v899 = vpack.c.bf16 %v883, %v883
      %v900 = vld [vmem:[%s706 + $0x1] sm:$0xff]
      %v901 = vld [vmem:[%s706 + $0x11] sm:$0xff]
      %v902 = vld [vmem:[%s706 + $0x21] sm:$0xff]
      %v903 = vld [vmem:[%s706 + $0x31] sm:$0xff]
      %v904 = vld [vmem:[%s706 + $0x41] sm:$0xff]
      %v905 = vld [vmem:[%s706 + $0x51] sm:$0xff]
      %v906 = vld [vmem:[%s706 + $0x61] sm:$0xff]
      %v907 = vld [vmem:[%s706 + $0x71] sm:$0xff]
      %v908 = vld [vmem:[%s706 + $0x81] sm:$0xff]
      %v909 = vld [vmem:[%s706 + $0x91] sm:$0xff]
      %v910 = vld [vmem:[%s706 + $0xa1] sm:$0xff]
      %v911 = vld [vmem:[%s706 + $0xb1] sm:$0xff]
      %v912 = vld [vmem:[%s706 + $0xc1] sm:$0xff]
      %v913 = vld [vmem:[%s706 + $0xd1] sm:$0xff]
      %v914 = vld [vmem:[%s706 + $0xe1] sm:$0xff]
      %v915 = vld [vmem:[%s706 + $0xf1] sm:$0xff]
      %v916 = vpack.c.bf16 %v900, %v900
      %v917 = vpack.c.bf16 %v901, %v901
      %v918 = vpack.c.bf16 %v902, %v902
      %v919 = vpack.c.bf16 %v903, %v903
      %v920 = vpack.c.bf16 %v904, %v904
      %v921 = vpack.c.bf16 %v905, %v905
      %v922 = vpack.c.bf16 %v906, %v906
      %v923 = vpack.c.bf16 %v907, %v907
      %v924 = vpack.c.bf16 %v908, %v908
      %v925 = vpack.c.bf16 %v909, %v909
      %v926 = vpack.c.bf16 %v910, %v910
      %v927 = vpack.c.bf16 %v911, %v911
      %v928 = vpack.c.bf16 %v912, %v912
      %v929 = vpack.c.bf16 %v913, %v913
      %v930 = vpack.c.bf16 %v914, %v914
      %v931 = vpack.c.bf16 %v915, %v915
      %s932 = scalar_lea.vmem [#allocation2], 32
      %v933 = vld [vmem:[%s932] sm:$0xff]
      %v934 = vld [vmem:[%s932 + $0x10] sm:$0xff]
      %v935 = vld [vmem:[%s932 + $0x20] sm:$0xff]
      %v936 = vld [vmem:[%s932 + $0x30] sm:$0xff]
      %v937 = vld [vmem:[%s932 + $0x40] sm:$0xff]
      %v938 = vld [vmem:[%s932 + $0x50] sm:$0xff]
      %v939 = vld [vmem:[%s932 + $0x60] sm:$0xff]
      %v940 = vld [vmem:[%s932 + $0x70] sm:$0xff]
      %v941 = vld [vmem:[%s932 + $0x80] sm:$0xff]
      %v942 = vld [vmem:[%s932 + $0x90] sm:$0xff]
      %v943 = vld [vmem:[%s932 + $0xa0] sm:$0xff]
      %v944 = vld [vmem:[%s932 + $0xb0] sm:$0xff]
      %v945 = vld [vmem:[%s932 + $0xc0] sm:$0xff]
      %v946 = vld [vmem:[%s932 + $0xd0] sm:$0xff]
      %v947 = vld [vmem:[%s932 + $0xe0] sm:$0xff]
      %v948 = vld [vmem:[%s932 + $0xf0] sm:$0xff]
      %v949 = vpack.c.bf16 %v933, %v933
      %v950 = vpack.c.bf16 %v934, %v934
      %v951 = vpack.c.bf16 %v935, %v935
      %v952 = vpack.c.bf16 %v936, %v936
      %v953 = vpack.c.bf16 %v937, %v937
      %v954 = vpack.c.bf16 %v938, %v938
      %v955 = vpack.c.bf16 %v939, %v939
      %v956 = vpack.c.bf16 %v940, %v940
      %v957 = vpack.c.bf16 %v941, %v941
      %v958 = vpack.c.bf16 %v942, %v942
      %v959 = vpack.c.bf16 %v943, %v943
      %v960 = vpack.c.bf16 %v944, %v944
      %v961 = vpack.c.bf16 %v945, %v945
      %v962 = vpack.c.bf16 %v946, %v946
      %v963 = vpack.c.bf16 %v947, %v947
      %v964 = vpack.c.bf16 %v948, %v948
      %v965 = vld [vmem:[%s932 + $0x1] sm:$0xff]
      %v966 = vld [vmem:[%s932 + $0x11] sm:$0xff]
      %v967 = vld [vmem:[%s932 + $0x21] sm:$0xff]
      %v968 = vld [vmem:[%s932 + $0x31] sm:$0xff]
      %v969 = vld [vmem:[%s932 + $0x41] sm:$0xff]
      %v970 = vld [vmem:[%s932 + $0x51] sm:$0xff]
      %v971 = vld [vmem:[%s932 + $0x61] sm:$0xff]
      %v972 = vld [vmem:[%s932 + $0x71] sm:$0xff]
      %v973 = vld [vmem:[%s932 + $0x81] sm:$0xff]
      %v974 = vld [vmem:[%s932 + $0x91] sm:$0xff]
      %v975 = vld [vmem:[%s932 + $0xa1] sm:$0xff]
      %v976 = vld [vmem:[%s932 + $0xb1] sm:$0xff]
      %v977 = vld [vmem:[%s932 + $0xc1] sm:$0xff]
      %v978 = vld [vmem:[%s932 + $0xd1] sm:$0xff]
      %v979 = vld [vmem:[%s932 + $0xe1] sm:$0xff]
      %v980 = vld [vmem:[%s932 + $0xf1] sm:$0xff]
      %v981 = vpack.c.bf16 %v965, %v965
      %v982 = vpack.c.bf16 %v966, %v966
      %v983 = vpack.c.bf16 %v967, %v967
      %v984 = vpack.c.bf16 %v968, %v968
      %v985 = vpack.c.bf16 %v969, %v969
      %v986 = vpack.c.bf16 %v970, %v970
      %v987 = vpack.c.bf16 %v971, %v971
      %v988 = vpack.c.bf16 %v972, %v972
      %v989 = vpack.c.bf16 %v973, %v973
      %v990 = vpack.c.bf16 %v974, %v974
      %v991 = vpack.c.bf16 %v975, %v975
      %v992 = vpack.c.bf16 %v976, %v976
      %v993 = vpack.c.bf16 %v977, %v977
      %v994 = vpack.c.bf16 %v978, %v978
      %v995 = vpack.c.bf16 %v979, %v979
      %v996 = vpack.c.bf16 %v980, %v980
      %1013 = vrot.lane.b32.xlu0 %v852, 16
      %v1014 = vpop.permute.xlu0 %1013
      %1015 = vrot.lane.b32.xlu0 %v853, 16
      %v1016 = vpop.permute.xlu0 %1015
      %1017 = vrot.lane.b32.xlu0 %v854, 16
      %v1018 = vpop.permute.xlu0 %1017
      %1019 = vrot.lane.b32.xlu0 %v855, 16
      %v1020 = vpop.permute.xlu0 %1019
      %1021 = vrot.lane.b32.xlu0 %v856, 16
      %v1022 = vpop.permute.xlu0 %1021
      %1023 = vrot.lane.b32.xlu0 %v857, 16
      %v1024 = vpop.permute.xlu0 %1023
      %1025 = vrot.lane.b32.xlu0 %v858, 16
      %v1026 = vpop.permute.xlu0 %1025
      %1027 = vrot.lane.b32.xlu0 %v859, 16
      %v1028 = vpop.permute.xlu0 %1027
      %1029 = vrot.lane.b32.xlu0 %v860, 16
      %v1030 = vpop.permute.xlu0 %1029
      %1031 = vrot.lane.b32.xlu0 %v861, 16
      %v1032 = vpop.permute.xlu0 %1031
      %1033 = vrot.lane.b32.xlu0 %v862, 16
      %v1034 = vpop.permute.xlu0 %1033
      %1035 = vrot.lane.b32.xlu0 %v863, 16
      %v1036 = vpop.permute.xlu0 %1035
      %1037 = vrot.lane.b32.xlu0 %v864, 16
      %v1038 = vpop.permute.xlu0 %1037
      %1039 = vrot.lane.b32.xlu0 %v865, 16
      %v1040 = vpop.permute.xlu0 %1039
      %1041 = vrot.lane.b32.xlu0 %v866, 16
      %v1042 = vpop.permute.xlu0 %1041
      %1043 = vrot.lane.b32.xlu0 %v867, 16
      %v1044 = vpop.permute.xlu0 %1043
      %1061 = vrot.lane.b32.xlu0 %v884, 32
      %v1062 = vpop.permute.xlu0 %1061
      %1063 = vrot.lane.b32.xlu0 %v885, 32
      %v1064 = vpop.permute.xlu0 %1063
      %1065 = vrot.lane.b32.xlu0 %v886, 32
      %v1066 = vpop.permute.xlu0 %1065
      %1067 = vrot.lane.b32.xlu0 %v887, 32
      %v1068 = vpop.permute.xlu0 %1067
      %1069 = vrot.lane.b32.xlu0 %v888, 32
      %v1070 = vpop.permute.xlu0 %1069
      %1071 = vrot.lane.b32.xlu0 %v889, 32
      %v1072 = vpop.permute.xlu0 %1071
      %1073 = vrot.lane.b32.xlu0 %v890, 32
      %v1074 = vpop.permute.xlu0 %1073
      %1075 = vrot.lane.b32.xlu0 %v891, 32
      %v1076 = vpop.permute.xlu0 %1075
      %1077 = vrot.lane.b32.xlu0 %v892, 32
      %v1078 = vpop.permute.xlu0 %1077
      %1079 = vrot.lane.b32.xlu0 %v893, 32
      %v1080 = vpop.permute.xlu0 %1079
      %1081 = vrot.lane.b32.xlu0 %v894, 32
      %v1082 = vpop.permute.xlu0 %1081
      %1083 = vrot.lane.b32.xlu0 %v895, 32
      %v1084 = vpop.permute.xlu0 %1083
      %1085 = vrot.lane.b32.xlu0 %v896, 32
      %v1086 = vpop.permute.xlu0 %1085
      %1087 = vrot.lane.b32.xlu0 %v897, 32
      %v1088 = vpop.permute.xlu0 %1087
      %1089 = vrot.lane.b32.xlu0 %v898, 32
      %v1090 = vpop.permute.xlu0 %1089
      %1091 = vrot.lane.b32.xlu0 %v899, 32
      %v1092 = vpop.permute.xlu0 %1091
      %1109 = vrot.lane.b32.xlu0 %v916, 48
      %v1110 = vpop.permute.xlu0 %1109
      %1111 = vrot.lane.b32.xlu0 %v917, 48
      %v1112 = vpop.permute.xlu0 %1111
      %1113 = vrot.lane.b32.xlu0 %v918, 48
      %v1114 = vpop.permute.xlu0 %1113
      %1115 = vrot.lane.b32.xlu0 %v919, 48
      %v1116 = vpop.permute.xlu0 %1115
      %1117 = vrot.lane.b32.xlu0 %v920, 48
      %v1118 = vpop.permute.xlu0 %1117
      %1119 = vrot.lane.b32.xlu0 %v921, 48
      %v1120 = vpop.permute.xlu0 %1119
      %1121 = vrot.lane.b32.xlu0 %v922, 48
      %v1122 = vpop.permute.xlu0 %1121
      %1123 = vrot.lane.b32.xlu0 %v923, 48
      %v1124 = vpop.permute.xlu0 %1123
      %1125 = vrot.lane.b32.xlu0 %v924, 48
      %v1126 = vpop.permute.xlu0 %1125
      %1127 = vrot.lane.b32.xlu0 %v925, 48
      %v1128 = vpop.permute.xlu0 %1127
      %1129 = vrot.lane.b32.xlu0 %v926, 48
      %v1130 = vpop.permute.xlu0 %1129
      %1131 = vrot.lane.b32.xlu0 %v927, 48
      %v1132 = vpop.permute.xlu0 %1131
      %1133 = vrot.lane.b32.xlu0 %v928, 48
      %v1134 = vpop.permute.xlu0 %1133
      %1135 = vrot.lane.b32.xlu0 %v929, 48
      %v1136 = vpop.permute.xlu0 %1135
      %1137 = vrot.lane.b32.xlu0 %v930, 48
      %v1138 = vpop.permute.xlu0 %1137
      %1139 = vrot.lane.b32.xlu0 %v931, 48
      %v1140 = vpop.permute.xlu0 %1139
      %1157 = vrot.lane.b32.xlu0 %v949, 64
      %v1158 = vpop.permute.xlu0 %1157
      %1159 = vrot.lane.b32.xlu0 %v950, 64
      %v1160 = vpop.permute.xlu0 %1159
      %1161 = vrot.lane.b32.xlu0 %v951, 64
      %v1162 = vpop.permute.xlu0 %1161
      %1163 = vrot.lane.b32.xlu0 %v952, 64
      %v1164 = vpop.permute.xlu0 %1163
      %1165 = vrot.lane.b32.xlu0 %v953, 64
      %v1166 = vpop.permute.xlu0 %1165
      %1167 = vrot.lane.b32.xlu0 %v954, 64
      %v1168 = vpop.permute.xlu0 %1167
      %1169 = vrot.lane.b32.xlu0 %v955, 64
      %v1170 = vpop.permute.xlu0 %1169
      %1171 = vrot.lane.b32.xlu0 %v956, 64
      %v1172 = vpop.permute.xlu0 %1171
      %1173 = vrot.lane.b32.xlu0 %v957, 64
      %v1174 = vpop.permute.xlu0 %1173
      %1175 = vrot.lane.b32.xlu0 %v958, 64
      %v1176 = vpop.permute.xlu0 %1175
      %1177 = vrot.lane.b32.xlu0 %v959, 64
      %v1178 = vpop.permute.xlu0 %1177
      %1179 = vrot.lane.b32.xlu0 %v960, 64
      %v1180 = vpop.permute.xlu0 %1179
      %1181 = vrot.lane.b32.xlu0 %v961, 64
      %v1182 = vpop.permute.xlu0 %1181
      %1183 = vrot.lane.b32.xlu0 %v962, 64
      %v1184 = vpop.permute.xlu0 %1183
      %1185 = vrot.lane.b32.xlu0 %v963, 64
      %v1186 = vpop.permute.xlu0 %1185
      %1187 = vrot.lane.b32.xlu0 %v964, 64
      %v1188 = vpop.permute.xlu0 %1187
      %1205 = vrot.lane.b32.xlu0 %v981, 80
      %v1206 = vpop.permute.xlu0 %1205
      %1207 = vrot.lane.b32.xlu0 %v982, 80
      %v1208 = vpop.permute.xlu0 %1207
      %1209 = vrot.lane.b32.xlu0 %v983, 80
      %v1210 = vpop.permute.xlu0 %1209
      %1211 = vrot.lane.b32.xlu0 %v984, 80
      %v1212 = vpop.permute.xlu0 %1211
      %1213 = vrot.lane.b32.xlu0 %v985, 80
      %v1214 = vpop.permute.xlu0 %1213
      %1215 = vrot.lane.b32.xlu0 %v986, 80
      %v1216 = vpop.permute.xlu0 %1215
      %1217 = vrot.lane.b32.xlu0 %v987, 80
      %v1218 = vpop.permute.xlu0 %1217
      %1219 = vrot.lane.b32.xlu0 %v988, 80
      %v1220 = vpop.permute.xlu0 %1219
      %1221 = vrot.lane.b32.xlu0 %v989, 80
      %v1222 = vpop.permute.xlu0 %1221
      %1223 = vrot.lane.b32.xlu0 %v990, 80
      %v1224 = vpop.permute.xlu0 %1223
      %1225 = vrot.lane.b32.xlu0 %v991, 80
      %v1226 = vpop.permute.xlu0 %1225
      %1227 = vrot.lane.b32.xlu0 %v992, 80
      %v1228 = vpop.permute.xlu0 %1227
      %1229 = vrot.lane.b32.xlu0 %v993, 80
      %v1230 = vpop.permute.xlu0 %1229
      %1231 = vrot.lane.b32.xlu0 %v994, 80
      %v1232 = vpop.permute.xlu0 %1231
      %1233 = vrot.lane.b32.xlu0 %v995, 80
      %v1234 = vpop.permute.xlu0 %1233
      %1235 = vrot.lane.b32.xlu0 %v996, 80
      %v1236 = vpop.permute.xlu0 %1235
      %v1239 = vsel %vm327, %v820, %v1014
      %v1242 = vsel %vm327, %v821, %v1016
      %v1245 = vsel %vm327, %v822, %v1018
      %v1248 = vsel %vm327, %v823, %v1020
      %v1251 = vsel %vm327, %v824, %v1022
      %v1254 = vsel %vm327, %v825, %v1024
      %v1257 = vsel %vm327, %v826, %v1026
      %v1260 = vsel %vm327, %v827, %v1028
      %v1263 = vsel %vm327, %v828, %v1030
      %v1266 = vsel %vm327, %v829, %v1032
      %v1269 = vsel %vm327, %v830, %v1034
      %v1272 = vsel %vm327, %v831, %v1036
      %v1275 = vsel %vm327, %v832, %v1038
      %v1278 = vsel %vm327, %v833, %v1040
      %v1281 = vsel %vm327, %v834, %v1042
      %v1284 = vsel %vm327, %v835, %v1044
      %vm1285 = vcmask 261120
      %v1287 = vsel %vm1285, %v1239, %v1062
      %v1289 = vsel %vm1285, %v1242, %v1064
      %v1291 = vsel %vm1285, %v1245, %v1066
      %v1293 = vsel %vm1285, %v1248, %v1068
      %v1295 = vsel %vm1285, %v1251, %v1070
      %v1297 = vsel %vm1285, %v1254, %v1072
      %v1299 = vsel %vm1285, %v1257, %v1074
      %v1301 = vsel %vm1285, %v1260, %v1076
      %v1303 = vsel %vm1285, %v1263, %v1078
      %v1305 = vsel %vm1285, %v1266, %v1080
      %v1307 = vsel %vm1285, %v1269, %v1082
      %v1309 = vsel %vm1285, %v1272, %v1084
      %v1311 = vsel %vm1285, %v1275, %v1086
      %v1313 = vsel %vm1285, %v1278, %v1088
      %v1315 = vsel %vm1285, %v1281, %v1090
      %v1317 = vsel %vm1285, %v1284, %v1092
      %vm1318 = vcmask 392192
      %v1320 = vsel %vm1318, %v1287, %v1110
      %v1322 = vsel %vm1318, %v1289, %v1112
      %v1324 = vsel %vm1318, %v1291, %v1114
      %v1326 = vsel %vm1318, %v1293, %v1116
      %v1328 = vsel %vm1318, %v1295, %v1118
      %v1330 = vsel %vm1318, %v1297, %v1120
      %v1332 = vsel %vm1318, %v1299, %v1122
      %v1334 = vsel %vm1318, %v1301, %v1124
      %v1336 = vsel %vm1318, %v1303, %v1126
      %v1338 = vsel %vm1318, %v1305, %v1128
      %v1340 = vsel %vm1318, %v1307, %v1130
      %v1342 = vsel %vm1318, %v1309, %v1132
      %v1344 = vsel %vm1318, %v1311, %v1134
      %v1346 = vsel %vm1318, %v1313, %v1136
      %v1348 = vsel %vm1318, %v1315, %v1138
      %v1350 = vsel %vm1318, %v1317, %v1140
      %vm1351 = vcmask 523264
      %v1353 = vsel %vm1351, %v1320, %v1158
      %v1355 = vsel %vm1351, %v1322, %v1160
      %v1357 = vsel %vm1351, %v1324, %v1162
      %v1359 = vsel %vm1351, %v1326, %v1164
      %v1361 = vsel %vm1351, %v1328, %v1166
      %v1363 = vsel %vm1351, %v1330, %v1168
      %v1365 = vsel %vm1351, %v1332, %v1170
      %v1367 = vsel %vm1351, %v1334, %v1172
      %v1369 = vsel %vm1351, %v1336, %v1174
      %v1371 = vsel %vm1351, %v1338, %v1176
      %v1373 = vsel %vm1351, %v1340, %v1178
      %v1375 = vsel %vm1351, %v1342, %v1180
      %v1377 = vsel %vm1351, %v1344, %v1182
      %v1379 = vsel %vm1351, %v1346, %v1184
      %v1381 = vsel %vm1351, %v1348, %v1186
      %v1383 = vsel %vm1351, %v1350, %v1188
      %vm1384 = vcmask 654336
      %v1386 = vsel %vm1384, %v1353, %v1206
      %v1388 = vsel %vm1384, %v1355, %v1208
      %v1390 = vsel %vm1384, %v1357, %v1210
      %v1392 = vsel %vm1384, %v1359, %v1212
      %v1394 = vsel %vm1384, %v1361, %v1214
      %v1396 = vsel %vm1384, %v1363, %v1216
      %v1398 = vsel %vm1384, %v1365, %v1218
      %v1400 = vsel %vm1384, %v1367, %v1220
      %v1402 = vsel %vm1384, %v1369, %v1222
      %v1404 = vsel %vm1384, %v1371, %v1224
      %v1406 = vsel %vm1384, %v1373, %v1226
      %v1408 = vsel %vm1384, %v1375, %v1228
      %v1410 = vsel %vm1384, %v1377, %v1230
      %v1412 = vsel %vm1384, %v1379, %v1232
      %v1414 = vsel %vm1384, %v1381, %v1234
      %v1416 = vsel %vm1384, %v1383, %v1236
      %v1417 = vld [vmem:[%s4] sm:$0xf]
      %v1418 = vld [vmem:[%s4 + $0x4] sm:$0xf]
      %v1419 = vld [vmem:[%s4 + $0x8] sm:$0xf]
      %v1420 = vld [vmem:[%s4 + $0xc] sm:$0xf]
      %v1421 = vld [vmem:[%s4 + $0x10] sm:$0xf]
      %v1422 = vld [vmem:[%s4 + $0x14] sm:$0xf]
      %v1423 = vld [vmem:[%s4 + $0x18] sm:$0xf]
      %v1424 = vld [vmem:[%s4 + $0x1c] sm:$0xf]
      %v1425 = vld [vmem:[%s4 + $0x20] sm:$0xf]
      %v1426 = vld [vmem:[%s4 + $0x24] sm:$0xf]
      %v1427 = vld [vmem:[%s4 + $0x28] sm:$0xf]
      %v1428 = vld [vmem:[%s4 + $0x2c] sm:$0xf]
      %v1429 = vld [vmem:[%s5] sm:$0x1]
      %v1431 = vlaneseq
      %v1432 = vshrl.u32 %v1431, 7
      %v1433 = vsub.s32 0, %v1432
      %v1434 = vrot.slane %v1429, %v1433
      %v1452 = vunpack.c.l.b16 %v1386
      %v1453 = vunpack.c.l.b16 %v1388
      %v1454 = vunpack.c.l.b16 %v1390
      %v1455 = vunpack.c.l.b16 %v1392
      %v1456 = vunpack.c.l.b16 %v1394
      %v1457 = vunpack.c.l.b16 %v1396
      %v1458 = vunpack.c.l.b16 %v1398
      %v1459 = vunpack.c.l.b16 %v1400
      %v1460 = vunpack.c.l.b16 %v1402
      %v1461 = vunpack.c.l.b16 %v1404
      %v1462 = vunpack.c.l.b16 %v1406
      %v1463 = vunpack.c.l.b16 %v1408
      %v1464 = vunpack.c.l.b16 %v1410
      %v1465 = vunpack.c.l.b16 %v1412
      %v1466 = vunpack.c.l.b16 %v1414
      %v1467 = vunpack.c.l.b16 %v1416
      %v1468 = vpack.c.b16 %v1453, %v1452
      %v1469 = vpack.c.b16 %v1455, %v1454
      %v1470 = vpack.c.b16 %v1457, %v1456
      %v1471 = vpack.c.b16 %v1459, %v1458
      %v1472 = vpack.c.b16 %v1461, %v1460
      %v1473 = vpack.c.b16 %v1463, %v1462
      %v1474 = vpack.c.b16 %v1465, %v1464
      %v1475 = vpack.c.b16 %v1467, %v1466
      %v1488 = vunpack.c.l.b16 %v1417
      %v1489 = vunpack.c.l.b16 %v1418
      %v1490 = vunpack.c.l.b16 %v1419
      %v1491 = vunpack.c.l.b16 %v1420
      %v1492 = vunpack.c.l.b16 %v1421
      %v1493 = vunpack.c.l.b16 %v1422
      %v1494 = vunpack.c.l.b16 %v1423
      %v1495 = vunpack.c.l.b16 %v1424
      %v1496 = vunpack.c.l.b16 %v1425
      %v1497 = vunpack.c.l.b16 %v1426
      %v1498 = vunpack.c.l.b16 %v1427
      %v1499 = vunpack.c.l.b16 %v1428
      %v1500 = vpack.c.b16 %v1489, %v1488
      %v1501 = vpack.c.b16 %v1491, %v1490
      %v1502 = vpack.c.b16 %v1493, %v1492
      %v1503 = vpack.c.b16 %v1495, %v1494
      %v1504 = vpack.c.b16 %v1497, %v1496
      %v1505 = vpack.c.b16 %v1499, %v1498
      %vm1512 = vcmask 785408
      %v1514 = vsel %vm1512, %v1468, 0
      %v1517 = vsel %vm1512, %v1469, 0
      %v1520 = vsel %vm1512, %v1470, 0
      %v1523 = vsel %vm1512, %v1471, 0
      %v1526 = vsel %vm1512, %v1472, 0
      %v1529 = vsel %vm1512, %v1473, 0
      %v1532 = vsel %vm1512, %v1474, 0
      %v1535 = vsel %vm1512, %v1475, 0
      %1537 = vmatprep.subr.bf16.mxu0 0
      %1538 = vmatpush1.bf16.msra.mxu0 %v1500
      %1539 = vmatprep.subr.bf16.mxu0 0
      %1540 = vmatpush1.bf16.msra.mxu0 %v1501
      %1541 = vmatprep.subr.bf16.mxu0 0
      %1542 = vmatpush1.bf16.msra.mxu0 %v1502
      %1543 = vmatprep.subr.bf16.mxu0 0
      %1544 = vmatpush1.bf16.msra.mxu0 %v1503
      %1545 = vmatprep.subr.bf16.mxu0 0
      %1546 = vmatpush1.bf16.msra.mxu0 %v1504
      %1547 = vmatprep.subr.bf16.mxu0 0
      %1548 = vmatpush1.bf16.msra.mxu0 %v1505
      %1549 = vmatprep.subr.bf16.mxu0 0
      %1550 = vmatpush1.bf16.msra.mxu0 0
      %1551 = vmatprep.subr.bf16.mxu0 0
      %1552 = vmatpush1.bf16.msra.mxu0 0
      %1553 = vmatprep.subr.bf16.mxu0 0
      %1554 = vmatpush1.bf16.msra.mxu0 0
      %1555 = vmatprep.subr.bf16.mxu0 0
      %1556 = vmatpush1.bf16.msra.mxu0 0
      %1557 = vmatprep.subr.bf16.mxu0 0
      %1558 = vmatpush1.bf16.msra.mxu0 0
      %1559 = vmatprep.subr.bf16.mxu0 0
      %1560 = vmatpush1.bf16.msra.mxu0 0
      %1561 = vmatprep.subr.bf16.mxu0 0
      %1562 = vmatpush1.bf16.msra.mxu0 0
      %1563 = vmatprep.subr.bf16.mxu0 0
      %1564 = vmatpush1.bf16.msra.mxu0 0
      %1565 = vmatprep.subr.bf16.mxu0 0
      %1566 = vmatpush1.bf16.msra.mxu0 0
      %1567 = vmatprep.subr.bf16.mxu0 0
      %1568 = vmatpush1.bf16.msra.mxu0 0
      %1569 = vmatprep.mubr.bf16.mxu0 0
      %1570 = vmatmul.mubr.bf16.gmra.mrb[0].mxu0 %v1514
      %v1571 = vpop.f32.mrb[0].mxu0
      %v1572 = vadd.f32 %v1434, %v1571
      %v1573 = vpop.f32.mrb[0].mxu0
      %v1574 = vpop.f32.mrb[0].mxu0
      %v1575 = vadd.f32 %v1434, %v1574
      %v1576 = vpop.f32.mrb[0].mxu0
      %1577 = vmatprep.mubr.bf16.mxu0 0
      %1578 = vmatmul.mubr.bf16.gmra.mrb[0].mxu0 %v1517
      %v1579 = vpop.f32.mrb[0].mxu0
      %v1580 = vadd.f32 %v1434, %v1579
      %v1581 = vpop.f32.mrb[0].mxu0
      %v1582 = vpop.f32.mrb[0].mxu0
      %v1583 = vadd.f32 %v1434, %v1582
      %v1584 = vpop.f32.mrb[0].mxu0
      %1585 = vmatprep.mubr.bf16.mxu0 0
      %1586 = vmatmul.mubr.bf16.gmra.mrb[0].mxu0 %v1520
      %v1587 = vpop.f32.mrb[0].mxu0
      %v1588 = vadd.f32 %v1434, %v1587
      %v1589 = vpop.f32.mrb[0].mxu0
      %v1590 = vpop.f32.mrb[0].mxu0
      %v1591 = vadd.f32 %v1434, %v1590
      %v1592 = vpop.f32.mrb[0].mxu0
      %1593 = vmatprep.mubr.bf16.mxu0 0
      %1594 = vmatmul.mubr.bf16.gmra.mrb[0].mxu0 %v1523
      %v1595 = vpop.f32.mrb[0].mxu0
      %v1596 = vadd.f32 %v1434, %v1595
      %v1597 = vpop.f32.mrb[0].mxu0
      %v1598 = vpop.f32.mrb[0].mxu0
      %v1599 = vadd.f32 %v1434, %v1598
      %v1600 = vpop.f32.mrb[0].mxu0
      %1601 = vmatprep.mubr.bf16.mxu0 0
      %1602 = vmatmul.mubr.bf16.gmra.mrb[0].mxu0 %v1526
      %v1603 = vpop.f32.mrb[0].mxu0
      %v1604 = vadd.f32 %v1434, %v1603
      %v1605 = vpop.f32.mrb[0].mxu0
      %v1606 = vpop.f32.mrb[0].mxu0
      %v1607 = vadd.f32 %v1434, %v1606
      %v1608 = vpop.f32.mrb[0].mxu0
      %1609 = vmatprep.mubr.bf16.mxu0 0
      %1610 = vmatmul.mubr.bf16.gmra.mrb[0].mxu0 %v1529
      %v1611 = vpop.f32.mrb[0].mxu0
      %v1612 = vadd.f32 %v1434, %v1611
      %v1613 = vpop.f32.mrb[0].mxu0
      %v1614 = vpop.f32.mrb[0].mxu0
      %v1615 = vadd.f32 %v1434, %v1614
      %v1616 = vpop.f32.mrb[0].mxu0
      %1617 = vmatprep.mubr.bf16.mxu0 0
      %1618 = vmatmul.mubr.bf16.gmra.mrb[0].mxu0 %v1532
      %v1619 = vpop.f32.mrb[0].mxu0
      %v1620 = vadd.f32 %v1434, %v1619
      %v1621 = vpop.f32.mrb[0].mxu0
      %v1622 = vpop.f32.mrb[0].mxu0
      %v1623 = vadd.f32 %v1434, %v1622
      %v1624 = vpop.f32.mrb[0].mxu0
      %1625 = vmatprep.mubr.bf16.mxu0 0
      %1626 = vmatmul.mubr.bf16.gmra.mrb[0].mxu0 %v1535
      %v1627 = vpop.f32.mrb[0].mxu0
      %v1628 = vadd.f32 %v1434, %v1627
      %v1629 = vpop.f32.mrb[0].mxu0
      %v1630 = vpop.f32.mrb[0].mxu0
      %v1631 = vadd.f32 %v1434, %v1630
      %v1632 = vpop.f32.mrb[0].mxu0
      %1633 = vdwg.mxu0
      %v1634 = vmax.f32 %v1572, 0.0
      %v1635 = vmax.f32 %v1575, 0.0
      %v1636 = vmax.f32 %v1580, 0.0
      %v1637 = vmax.f32 %v1583, 0.0
      %v1638 = vmax.f32 %v1588, 0.0
      %v1639 = vmax.f32 %v1591, 0.0
      %v1640 = vmax.f32 %v1596, 0.0
      %v1641 = vmax.f32 %v1599, 0.0
      %v1642 = vmax.f32 %v1604, 0.0
      %v1643 = vmax.f32 %v1607, 0.0
      %v1644 = vmax.f32 %v1612, 0.0
      %v1645 = vmax.f32 %v1615, 0.0
      %v1646 = vmax.f32 %v1620, 0.0
      %v1647 = vmax.f32 %v1623, 0.0
      %v1648 = vmax.f32 %v1628, 0.0
      %v1649 = vmax.f32 %v1631, 0.0
      %1666 = vrot.lane.b32.xlu0 %v1634, 8
      %v1667 = vpop.permute.xlu0 %1666
      %1668 = vrot.lane.b32.xlu0 %v1635, 8
      %v1669 = vpop.permute.xlu0 %1668
      %1670 = vrot.lane.b32.xlu0 %v1636, 8
      %v1671 = vpop.permute.xlu0 %1670
      %1672 = vrot.lane.b32.xlu0 %v1637, 8
      %v1673 = vpop.permute.xlu0 %1672
      %1674 = vrot.lane.b32.xlu0 %v1638, 8
      %v1675 = vpop.permute.xlu0 %1674
      %1676 = vrot.lane.b32.xlu0 %v1639, 8
      %v1677 = vpop.permute.xlu0 %1676
      %1678 = vrot.lane.b32.xlu0 %v1640, 8
      %v1679 = vpop.permute.xlu0 %1678
      %1680 = vrot.lane.b32.xlu0 %v1641, 8
      %v1681 = vpop.permute.xlu0 %1680
      %1682 = vrot.lane.b32.xlu0 %v1642, 8
      %v1683 = vpop.permute.xlu0 %1682
      %1684 = vrot.lane.b32.xlu0 %v1643, 8
      %v1685 = vpop.permute.xlu0 %1684
      %1686 = vrot.lane.b32.xlu0 %v1644, 8
      %v1687 = vpop.permute.xlu0 %1686
      %1688 = vrot.lane.b32.xlu0 %v1645, 8
      %v1689 = vpop.permute.xlu0 %1688
      %1690 = vrot.lane.b32.xlu0 %v1646, 8
      %v1691 = vpop.permute.xlu0 %1690
      %1692 = vrot.lane.b32.xlu0 %v1647, 8
      %v1693 = vpop.permute.xlu0 %1692
      %1694 = vrot.lane.b32.xlu0 %v1648, 8
      %v1695 = vpop.permute.xlu0 %1694
      %1696 = vrot.lane.b32.xlu0 %v1649, 8
      %v1697 = vpop.permute.xlu0 %1696
      %s1714 = scalar_lea.vmem [#allocation3], 16
      %1715 = vst.msk [vmem:[%s1714] sm:$0xff] %vm787, %v1667
      %1716 = vst.msk [vmem:[%s1714 + $0x10] sm:$0xff] %vm787, %v1669
      %1717 = vst.msk [vmem:[%s1714 + $0x20] sm:$0xff] %vm787, %v1671
      %1718 = vst.msk [vmem:[%s1714 + $0x30] sm:$0xff] %vm787, %v1673
      %1719 = vst.msk [vmem:[%s1714 + $0x40] sm:$0xff] %vm787, %v1675
      %1720 = vst.msk [vmem:[%s1714 + $0x50] sm:$0xff] %vm787, %v1677
      %1721 = vst.msk [vmem:[%s1714 + $0x60] sm:$0xff] %vm787, %v1679
      %1722 = vst.msk [vmem:[%s1714 + $0x70] sm:$0xff] %vm787, %v1681
      %1723 = vst.msk [vmem:[%s1714 + $0x80] sm:$0xff] %vm787, %v1683
      %1724 = vst.msk [vmem:[%s1714 + $0x90] sm:$0xff] %vm787, %v1685
      %1725 = vst.msk [vmem:[%s1714 + $0xa0] sm:$0xff] %vm787, %v1687
      %1726 = vst.msk [vmem:[%s1714 + $0xb0] sm:$0xff] %vm787, %v1689
      %1727 = vst.msk [vmem:[%s1714 + $0xc0] sm:$0xff] %vm787, %v1691
      %1728 = vst.msk [vmem:[%s1714 + $0xd0] sm:$0xff] %vm787, %v1693
      %1729 = vst.msk [vmem:[%s1714 + $0xe0] sm:$0xff] %vm787, %v1695
      %1730 = vst.msk [vmem:[%s1714 + $0xf0] sm:$0xff] %vm787, %v1697
      %1731 = vrot.lane.b32.xlu0 %v1634, 120
      %v1732 = vpop.permute.xlu0 %1731
      %1733 = vrot.lane.b32.xlu0 %v1635, 120
      %v1734 = vpop.permute.xlu0 %1733
      %1735 = vrot.lane.b32.xlu0 %v1636, 120
      %v1736 = vpop.permute.xlu0 %1735
      %1737 = vrot.lane.b32.xlu0 %v1637, 120
      %v1738 = vpop.permute.xlu0 %1737
      %1739 = vrot.lane.b32.xlu0 %v1638, 120
      %v1740 = vpop.permute.xlu0 %1739
      %1741 = vrot.lane.b32.xlu0 %v1639, 120
      %v1742 = vpop.permute.xlu0 %1741
      %1743 = vrot.lane.b32.xlu0 %v1640, 120
      %v1744 = vpop.permute.xlu0 %1743
      %1745 = vrot.lane.b32.xlu0 %v1641, 120
      %v1746 = vpop.permute.xlu0 %1745
      %1747 = vrot.lane.b32.xlu0 %v1642, 120
      %v1748 = vpop.permute.xlu0 %1747
      %1749 = vrot.lane.b32.xlu0 %v1643, 120
      %v1750 = vpop.permute.xlu0 %1749
      %1751 = vrot.lane.b32.xlu0 %v1644, 120
      %v1752 = vpop.permute.xlu0 %1751
      %1753 = vrot.lane.b32.xlu0 %v1645, 120
      %v1754 = vpop.permute.xlu0 %1753
      %1755 = vrot.lane.b32.xlu0 %v1646, 120
      %v1756 = vpop.permute.xlu0 %1755
      %1757 = vrot.lane.b32.xlu0 %v1647, 120
      %v1758 = vpop.permute.xlu0 %1757
      %1759 = vrot.lane.b32.xlu0 %v1648, 120
      %v1760 = vpop.permute.xlu0 %1759
      %1761 = vrot.lane.b32.xlu0 %v1649, 120
      %v1762 = vpop.permute.xlu0 %1761
      %1779 = vst.msk [vmem:[%s1714 + $0x1] sm:$0xff] %vm431, %v1732
      %1780 = vst.msk [vmem:[%s1714 + $0x11] sm:$0xff] %vm431, %v1734
      %1781 = vst.msk [vmem:[%s1714 + $0x21] sm:$0xff] %vm431, %v1736
      %1782 = vst.msk [vmem:[%s1714 + $0x31] sm:$0xff] %vm431, %v1738
      %1783 = vst.msk [vmem:[%s1714 + $0x41] sm:$0xff] %vm431, %v1740
      %1784 = vst.msk [vmem:[%s1714 + $0x51] sm:$0xff] %vm431, %v1742
      %1785 = vst.msk [vmem:[%s1714 + $0x61] sm:$0xff] %vm431, %v1744
      %1786 = vst.msk [vmem:[%s1714 + $0x71] sm:$0xff] %vm431, %v1746
      %1787 = vst.msk [vmem:[%s1714 + $0x81] sm:$0xff] %vm431, %v1748
      %1788 = vst.msk [vmem:[%s1714 + $0x91] sm:$0xff] %vm431, %v1750
      %1789 = vst.msk [vmem:[%s1714 + $0xa1] sm:$0xff] %vm431, %v1752
      %1790 = vst.msk [vmem:[%s1714 + $0xb1] sm:$0xff] %vm431, %v1754
      %1791 = vst.msk [vmem:[%s1714 + $0xc1] sm:$0xff] %vm431, %v1756
      %1792 = vst.msk [vmem:[%s1714 + $0xd1] sm:$0xff] %vm431, %v1758
      %1793 = vst.msk [vmem:[%s1714 + $0xe1] sm:$0xff] %vm431, %v1760
      %1794 = vst.msk [vmem:[%s1714 + $0xf1] sm:$0xff] %vm431, %v1762
      %v1795 = vld [vmem:[#allocation3] sm:$0xff]
      %v1796 = vld [vmem:[#allocation3 + $0x10] sm:$0xff]
      %v1797 = vld [vmem:[#allocation3 + $0x20] sm:$0xff]
      %v1798 = vld [vmem:[#allocation3 + $0x30] sm:$0xff]
      %v1799 = vld [vmem:[#allocation3 + $0x40] sm:$0xff]
      %v1800 = vld [vmem:[#allocation3 + $0x50] sm:$0xff]
      %v1801 = vld [vmem:[#allocation3 + $0x60] sm:$0xff]
      %v1802 = vld [vmem:[#allocation3 + $0x70] sm:$0xff]
      %v1803 = vld [vmem:[#allocation3 + $0x80] sm:$0xff]
      %v1804 = vld [vmem:[#allocation3 + $0x90] sm:$0xff]
      %v1805 = vld [vmem:[#allocation3 + $0xa0] sm:$0xff]
      %v1806 = vld [vmem:[#allocation3 + $0xb0] sm:$0xff]
      %v1807 = vld [vmem:[#allocation3 + $0xc0] sm:$0xff]
      %v1808 = vld [vmem:[#allocation3 + $0xd0] sm:$0xff]
      %v1809 = vld [vmem:[#allocation3 + $0xe0] sm:$0xff]
      %v1810 = vld [vmem:[#allocation3 + $0xf0] sm:$0xff]
      %v1811 = vpack.c.bf16 %v1795, %v1795
      %v1812 = vpack.c.bf16 %v1796, %v1796
      %v1813 = vpack.c.bf16 %v1797, %v1797
      %v1814 = vpack.c.bf16 %v1798, %v1798
      %v1815 = vpack.c.bf16 %v1799, %v1799
      %v1816 = vpack.c.bf16 %v1800, %v1800
      %v1817 = vpack.c.bf16 %v1801, %v1801
      %v1818 = vpack.c.bf16 %v1802, %v1802
      %v1819 = vpack.c.bf16 %v1803, %v1803
      %v1820 = vpack.c.bf16 %v1804, %v1804
      %v1821 = vpack.c.bf16 %v1805, %v1805
      %v1822 = vpack.c.bf16 %v1806, %v1806
      %v1823 = vpack.c.bf16 %v1807, %v1807
      %v1824 = vpack.c.bf16 %v1808, %v1808
      %v1825 = vpack.c.bf16 %v1809, %v1809
      %v1826 = vpack.c.bf16 %v1810, %v1810
      %v1827 = vld [vmem:[#allocation3 + $0x1] sm:$0xff]
      %v1828 = vld [vmem:[#allocation3 + $0x11] sm:$0xff]
      %v1829 = vld [vmem:[#allocation3 + $0x21] sm:$0xff]
      %v1830 = vld [vmem:[#allocation3 + $0x31] sm:$0xff]
      %v1831 = vld [vmem:[#allocation3 + $0x41] sm:$0xff]
      %v1832 = vld [vmem:[#allocation3 + $0x51] sm:$0xff]
      %v1833 = vld [vmem:[#allocation3 + $0x61] sm:$0xff]
      %v1834 = vld [vmem:[#allocation3 + $0x71] sm:$0xff]
      %v1835 = vld [vmem:[#allocation3 + $0x81] sm:$0xff]
      %v1836 = vld [vmem:[#allocation3 + $0x91] sm:$0xff]
      %v1837 = vld [vmem:[#allocation3 + $0xa1] sm:$0xff]
      %v1838 = vld [vmem:[#allocation3 + $0xb1] sm:$0xff]
      %v1839 = vld [vmem:[#allocation3 + $0xc1] sm:$0xff]
      %v1840 = vld [vmem:[#allocation3 + $0xd1] sm:$0xff]
      %v1841 = vld [vmem:[#allocation3 + $0xe1] sm:$0xff]
      %v1842 = vld [vmem:[#allocation3 + $0xf1] sm:$0xff]
      %v1843 = vpack.c.bf16 %v1827, %v1827
      %v1844 = vpack.c.bf16 %v1828, %v1828
      %v1845 = vpack.c.bf16 %v1829, %v1829
      %v1846 = vpack.c.bf16 %v1830, %v1830
      %v1847 = vpack.c.bf16 %v1831, %v1831
      %v1848 = vpack.c.bf16 %v1832, %v1832
      %v1849 = vpack.c.bf16 %v1833, %v1833
      %v1850 = vpack.c.bf16 %v1834, %v1834
      %v1851 = vpack.c.bf16 %v1835, %v1835
      %v1852 = vpack.c.bf16 %v1836, %v1836
      %v1853 = vpack.c.bf16 %v1837, %v1837
      %v1854 = vpack.c.bf16 %v1838, %v1838
      %v1855 = vpack.c.bf16 %v1839, %v1839
      %v1856 = vpack.c.bf16 %v1840, %v1840
      %v1857 = vpack.c.bf16 %v1841, %v1841
      %v1858 = vpack.c.bf16 %v1842, %v1842
      %v1859 = vld [vmem:[%s1714] sm:$0xff]
      %v1860 = vld [vmem:[%s1714 + $0x10] sm:$0xff]
      %v1861 = vld [vmem:[%s1714 + $0x20] sm:$0xff]
      %v1862 = vld [vmem:[%s1714 + $0x30] sm:$0xff]
      %v1863 = vld [vmem:[%s1714 + $0x40] sm:$0xff]
      %v1864 = vld [vmem:[%s1714 + $0x50] sm:$0xff]
      %v1865 = vld [vmem:[%s1714 + $0x60] sm:$0xff]
      %v1866 = vld [vmem:[%s1714 + $0x70] sm:$0xff]
      %v1867 = vld [vmem:[%s1714 + $0x80] sm:$0xff]
      %v1868 = vld [vmem:[%s1714 + $0x90] sm:$0xff]
      %v1869 = vld [vmem:[%s1714 + $0xa0] sm:$0xff]
      %v1870 = vld [vmem:[%s1714 + $0xb0] sm:$0xff]
      %v1871 = vld [vmem:[%s1714 + $0xc0] sm:$0xff]
      %v1872 = vld [vmem:[%s1714 + $0xd0] sm:$0xff]
      %v1873 = vld [vmem:[%s1714 + $0xe0] sm:$0xff]
      %v1874 = vld [vmem:[%s1714 + $0xf0] sm:$0xff]
      %v1875 = vpack.c.bf16 %v1859, %v1859
      %v1876 = vpack.c.bf16 %v1860, %v1860
      %v1877 = vpack.c.bf16 %v1861, %v1861
      %v1878 = vpack.c.bf16 %v1862, %v1862
      %v1879 = vpack.c.bf16 %v1863, %v1863
      %v1880 = vpack.c.bf16 %v1864, %v1864
      %v1881 = vpack.c.bf16 %v1865, %v1865
      %v1882 = vpack.c.bf16 %v1866, %v1866
      %v1883 = vpack.c.bf16 %v1867, %v1867
      %v1884 = vpack.c.bf16 %v1868, %v1868
      %v1885 = vpack.c.bf16 %v1869, %v1869
      %v1886 = vpack.c.bf16 %v1870, %v1870
      %v1887 = vpack.c.bf16 %v1871, %v1871
      %v1888 = vpack.c.bf16 %v1872, %v1872
      %v1889 = vpack.c.bf16 %v1873, %v1873
      %v1890 = vpack.c.bf16 %v1874, %v1874
      %v1891 = vld [vmem:[%s1714 + $0x1] sm:$0xff]
      %v1892 = vld [vmem:[%s1714 + $0x11] sm:$0xff]
      %v1893 = vld [vmem:[%s1714 + $0x21] sm:$0xff]
      %v1894 = vld [vmem:[%s1714 + $0x31] sm:$0xff]
      %v1895 = vld [vmem:[%s1714 + $0x41] sm:$0xff]
      %v1896 = vld [vmem:[%s1714 + $0x51] sm:$0xff]
      %v1897 = vld [vmem:[%s1714 + $0x61] sm:$0xff]
      %v1898 = vld [vmem:[%s1714 + $0x71] sm:$0xff]
      %v1899 = vld [vmem:[%s1714 + $0x81] sm:$0xff]
      %v1900 = vld [vmem:[%s1714 + $0x91] sm:$0xff]
      %v1901 = vld [vmem:[%s1714 + $0xa1] sm:$0xff]
      %v1902 = vld [vmem:[%s1714 + $0xb1] sm:$0xff]
      %v1903 = vld [vmem:[%s1714 + $0xc1] sm:$0xff]
      %v1904 = vld [vmem:[%s1714 + $0xd1] sm:$0xff]
      %v1905 = vld [vmem:[%s1714 + $0xe1] sm:$0xff]
      %v1906 = vld [vmem:[%s1714 + $0xf1] sm:$0xff]
      %v1907 = vpack.c.bf16 %v1891, %v1891
      %v1908 = vpack.c.bf16 %v1892, %v1892
      %v1909 = vpack.c.bf16 %v1893, %v1893
      %v1910 = vpack.c.bf16 %v1894, %v1894
      %v1911 = vpack.c.bf16 %v1895, %v1895
      %v1912 = vpack.c.bf16 %v1896, %v1896
      %v1913 = vpack.c.bf16 %v1897, %v1897
      %v1914 = vpack.c.bf16 %v1898, %v1898
      %v1915 = vpack.c.bf16 %v1899, %v1899
      %v1916 = vpack.c.bf16 %v1900, %v1900
      %v1917 = vpack.c.bf16 %v1901, %v1901
      %v1918 = vpack.c.bf16 %v1902, %v1902
      %v1919 = vpack.c.bf16 %v1903, %v1903
      %v1920 = vpack.c.bf16 %v1904, %v1904
      %v1921 = vpack.c.bf16 %v1905, %v1905
      %v1922 = vpack.c.bf16 %v1906, %v1906
      %s1923 = scalar_lea.vmem [#allocation3], 32
      %v1924 = vld [vmem:[%s1923] sm:$0xff]
      %v1925 = vld [vmem:[%s1923 + $0x10] sm:$0xff]
      %v1926 = vld [vmem:[%s1923 + $0x20] sm:$0xff]
      %v1927 = vld [vmem:[%s1923 + $0x30] sm:$0xff]
      %v1928 = vld [vmem:[%s1923 + $0x40] sm:$0xff]
      %v1929 = vld [vmem:[%s1923 + $0x50] sm:$0xff]
      %v1930 = vld [vmem:[%s1923 + $0x60] sm:$0xff]
      %v1931 = vld [vmem:[%s1923 + $0x70] sm:$0xff]
      %v1932 = vld [vmem:[%s1923 + $0x80] sm:$0xff]
      %v1933 = vld [vmem:[%s1923 + $0x90] sm:$0xff]
      %v1934 = vld [vmem:[%s1923 + $0xa0] sm:$0xff]
      %v1935 = vld [vmem:[%s1923 + $0xb0] sm:$0xff]
      %v1936 = vld [vmem:[%s1923 + $0xc0] sm:$0xff]
      %v1937 = vld [vmem:[%s1923 + $0xd0] sm:$0xff]
      %v1938 = vld [vmem:[%s1923 + $0xe0] sm:$0xff]
      %v1939 = vld [vmem:[%s1923 + $0xf0] sm:$0xff]
      %v1940 = vpack.c.bf16 %v1924, %v1924
      %v1941 = vpack.c.bf16 %v1925, %v1925
      %v1942 = vpack.c.bf16 %v1926, %v1926
      %v1943 = vpack.c.bf16 %v1927, %v1927
      %v1944 = vpack.c.bf16 %v1928, %v1928
      %v1945 = vpack.c.bf16 %v1929, %v1929
      %v1946 = vpack.c.bf16 %v1930, %v1930
      %v1947 = vpack.c.bf16 %v1931, %v1931
      %v1948 = vpack.c.bf16 %v1932, %v1932
      %v1949 = vpack.c.bf16 %v1933, %v1933
      %v1950 = vpack.c.bf16 %v1934, %v1934
      %v1951 = vpack.c.bf16 %v1935, %v1935
      %v1952 = vpack.c.bf16 %v1936, %v1936
      %v1953 = vpack.c.bf16 %v1937, %v1937
      %v1954 = vpack.c.bf16 %v1938, %v1938
      %v1955 = vpack.c.bf16 %v1939, %v1939
      %v1956 = vld [vmem:[%s1923 + $0x1] sm:$0xff]
      %v1957 = vld [vmem:[%s1923 + $0x11] sm:$0xff]
      %v1958 = vld [vmem:[%s1923 + $0x21] sm:$0xff]
      %v1959 = vld [vmem:[%s1923 + $0x31] sm:$0xff]
      %v1960 = vld [vmem:[%s1923 + $0x41] sm:$0xff]
      %v1961 = vld [vmem:[%s1923 + $0x51] sm:$0xff]
      %v1962 = vld [vmem:[%s1923 + $0x61] sm:$0xff]
      %v1963 = vld [vmem:[%s1923 + $0x71] sm:$0xff]
      %v1964 = vld [vmem:[%s1923 + $0x81] sm:$0xff]
      %v1965 = vld [vmem:[%s1923 + $0x91] sm:$0xff]
      %v1966 = vld [vmem:[%s1923 + $0xa1] sm:$0xff]
      %v1967 = vld [vmem:[%s1923 + $0xb1] sm:$0xff]
      %v1968 = vld [vmem:[%s1923 + $0xc1] sm:$0xff]
      %v1969 = vld [vmem:[%s1923 + $0xd1] sm:$0xff]
      %v1970 = vld [vmem:[%s1923 + $0xe1] sm:$0xff]
      %v1971 = vld [vmem:[%s1923 + $0xf1] sm:$0xff]
      %v1972 = vpack.c.bf16 %v1956, %v1956
      %v1973 = vpack.c.bf16 %v1957, %v1957
      %v1974 = vpack.c.bf16 %v1958, %v1958
      %v1975 = vpack.c.bf16 %v1959, %v1959
      %v1976 = vpack.c.bf16 %v1960, %v1960
      %v1977 = vpack.c.bf16 %v1961, %v1961
      %v1978 = vpack.c.bf16 %v1962, %v1962
      %v1979 = vpack.c.bf16 %v1963, %v1963
      %v1980 = vpack.c.bf16 %v1964, %v1964
      %v1981 = vpack.c.bf16 %v1965, %v1965
      %v1982 = vpack.c.bf16 %v1966, %v1966
      %v1983 = vpack.c.bf16 %v1967, %v1967
      %v1984 = vpack.c.bf16 %v1968, %v1968
      %v1985 = vpack.c.bf16 %v1969, %v1969
      %v1986 = vpack.c.bf16 %v1970, %v1970
      %v1987 = vpack.c.bf16 %v1971, %v1971
      %2004 = vrot.lane.b32.xlu0 %v1843, 16
      %v2005 = vpop.permute.xlu0 %2004
      %2006 = vrot.lane.b32.xlu0 %v1844, 16
      %v2007 = vpop.permute.xlu0 %2006
      %2008 = vrot.lane.b32.xlu0 %v1845, 16
      %v2009 = vpop.permute.xlu0 %2008
      %2010 = vrot.lane.b32.xlu0 %v1846, 16
      %v2011 = vpop.permute.xlu0 %2010
      %2012 = vrot.lane.b32.xlu0 %v1847, 16
      %v2013 = vpop.permute.xlu0 %2012
      %2014 = vrot.lane.b32.xlu0 %v1848, 16
      %v2015 = vpop.permute.xlu0 %2014
      %2016 = vrot.lane.b32.xlu0 %v1849, 16
      %v2017 = vpop.permute.xlu0 %2016
      %2018 = vrot.lane.b32.xlu0 %v1850, 16
      %v2019 = vpop.permute.xlu0 %2018
      %2020 = vrot.lane.b32.xlu0 %v1851, 16
      %v2021 = vpop.permute.xlu0 %2020
      %2022 = vrot.lane.b32.xlu0 %v1852, 16
      %v2023 = vpop.permute.xlu0 %2022
      %2024 = vrot.lane.b32.xlu0 %v1853, 16
      %v2025 = vpop.permute.xlu0 %2024
      %2026 = vrot.lane.b32.xlu0 %v1854, 16
      %v2027 = vpop.permute.xlu0 %2026
      %2028 = vrot.lane.b32.xlu0 %v1855, 16
      %v2029 = vpop.permute.xlu0 %2028
      %2030 = vrot.lane.b32.xlu0 %v1856, 16
      %v2031 = vpop.permute.xlu0 %2030
      %2032 = vrot.lane.b32.xlu0 %v1857, 16
      %v2033 = vpop.permute.xlu0 %2032
      %2034 = vrot.lane.b32.xlu0 %v1858, 16
      %v2035 = vpop.permute.xlu0 %2034
      %2052 = vrot.lane.b32.xlu0 %v1875, 32
      %v2053 = vpop.permute.xlu0 %2052
      %2054 = vrot.lane.b32.xlu0 %v1876, 32
      %v2055 = vpop.permute.xlu0 %2054
      %2056 = vrot.lane.b32.xlu0 %v1877, 32
      %v2057 = vpop.permute.xlu0 %2056
      %2058 = vrot.lane.b32.xlu0 %v1878, 32
      %v2059 = vpop.permute.xlu0 %2058
      %2060 = vrot.lane.b32.xlu0 %v1879, 32
      %v2061 = vpop.permute.xlu0 %2060
      %2062 = vrot.lane.b32.xlu0 %v1880, 32
      %v2063 = vpop.permute.xlu0 %2062
      %2064 = vrot.lane.b32.xlu0 %v1881, 32
      %v2065 = vpop.permute.xlu0 %2064
      %2066 = vrot.lane.b32.xlu0 %v1882, 32
      %v2067 = vpop.permute.xlu0 %2066
      %2068 = vrot.lane.b32.xlu0 %v1883, 32
      %v2069 = vpop.permute.xlu0 %2068
      %2070 = vrot.lane.b32.xlu0 %v1884, 32
      %v2071 = vpop.permute.xlu0 %2070
      %2072 = vrot.lane.b32.xlu0 %v1885, 32
      %v2073 = vpop.permute.xlu0 %2072
      %2074 = vrot.lane.b32.xlu0 %v1886, 32
      %v2075 = vpop.permute.xlu0 %2074
      %2076 = vrot.lane.b32.xlu0 %v1887, 32
      %v2077 = vpop.permute.xlu0 %2076
      %2078 = vrot.lane.b32.xlu0 %v1888, 32
      %v2079 = vpop.permute.xlu0 %2078
      %2080 = vrot.lane.b32.xlu0 %v1889, 32
      %v2081 = vpop.permute.xlu0 %2080
      %2082 = vrot.lane.b32.xlu0 %v1890, 32
      %v2083 = vpop.permute.xlu0 %2082
      %2100 = vrot.lane.b32.xlu0 %v1907, 48
      %v2101 = vpop.permute.xlu0 %2100
      %2102 = vrot.lane.b32.xlu0 %v1908, 48
      %v2103 = vpop.permute.xlu0 %2102
      %2104 = vrot.lane.b32.xlu0 %v1909, 48
      %v2105 = vpop.permute.xlu0 %2104
      %2106 = vrot.lane.b32.xlu0 %v1910, 48
      %v2107 = vpop.permute.xlu0 %2106
      %2108 = vrot.lane.b32.xlu0 %v1911, 48
      %v2109 = vpop.permute.xlu0 %2108
      %2110 = vrot.lane.b32.xlu0 %v1912, 48
      %v2111 = vpop.permute.xlu0 %2110
      %2112 = vrot.lane.b32.xlu0 %v1913, 48
      %v2113 = vpop.permute.xlu0 %2112
      %2114 = vrot.lane.b32.xlu0 %v1914, 48
      %v2115 = vpop.permute.xlu0 %2114
      %2116 = vrot.lane.b32.xlu0 %v1915, 48
      %v2117 = vpop.permute.xlu0 %2116
      %2118 = vrot.lane.b32.xlu0 %v1916, 48
      %v2119 = vpop.permute.xlu0 %2118
      %2120 = vrot.lane.b32.xlu0 %v1917, 48
      %v2121 = vpop.permute.xlu0 %2120
      %2122 = vrot.lane.b32.xlu0 %v1918, 48
      %v2123 = vpop.permute.xlu0 %2122
      %2124 = vrot.lane.b32.xlu0 %v1919, 48
      %v2125 = vpop.permute.xlu0 %2124
      %2126 = vrot.lane.b32.xlu0 %v1920, 48
      %v2127 = vpop.permute.xlu0 %2126
      %2128 = vrot.lane.b32.xlu0 %v1921, 48
      %v2129 = vpop.permute.xlu0 %2128
      %2130 = vrot.lane.b32.xlu0 %v1922, 48
      %v2131 = vpop.permute.xlu0 %2130
      %2148 = vrot.lane.b32.xlu0 %v1940, 64
      %v2149 = vpop.permute.xlu0 %2148
      %2150 = vrot.lane.b32.xlu0 %v1941, 64
      %v2151 = vpop.permute.xlu0 %2150
      %2152 = vrot.lane.b32.xlu0 %v1942, 64
      %v2153 = vpop.permute.xlu0 %2152
      %2154 = vrot.lane.b32.xlu0 %v1943, 64
      %v2155 = vpop.permute.xlu0 %2154
      %2156 = vrot.lane.b32.xlu0 %v1944, 64
      %v2157 = vpop.permute.xlu0 %2156
      %2158 = vrot.lane.b32.xlu0 %v1945, 64
      %v2159 = vpop.permute.xlu0 %2158
      %2160 = vrot.lane.b32.xlu0 %v1946, 64
      %v2161 = vpop.permute.xlu0 %2160
      %2162 = vrot.lane.b32.xlu0 %v1947, 64
      %v2163 = vpop.permute.xlu0 %2162
      %2164 = vrot.lane.b32.xlu0 %v1948, 64
      %v2165 = vpop.permute.xlu0 %2164
      %2166 = vrot.lane.b32.xlu0 %v1949, 64
      %v2167 = vpop.permute.xlu0 %2166
      %2168 = vrot.lane.b32.xlu0 %v1950, 64
      %v2169 = vpop.permute.xlu0 %2168
      %2170 = vrot.lane.b32.xlu0 %v1951, 64
      %v2171 = vpop.permute.xlu0 %2170
      %2172 = vrot.lane.b32.xlu0 %v1952, 64
      %v2173 = vpop.permute.xlu0 %2172
      %2174 = vrot.lane.b32.xlu0 %v1953, 64
      %v2175 = vpop.permute.xlu0 %2174
      %2176 = vrot.lane.b32.xlu0 %v1954, 64
      %v2177 = vpop.permute.xlu0 %2176
      %2178 = vrot.lane.b32.xlu0 %v1955, 64
      %v2179 = vpop.permute.xlu0 %2178
      %2196 = vrot.lane.b32.xlu0 %v1972, 80
      %v2197 = vpop.permute.xlu0 %2196
      %2198 = vrot.lane.b32.xlu0 %v1973, 80
      %v2199 = vpop.permute.xlu0 %2198
      %2200 = vrot.lane.b32.xlu0 %v1974, 80
      %v2201 = vpop.permute.xlu0 %2200
      %2202 = vrot.lane.b32.xlu0 %v1975, 80
      %v2203 = vpop.permute.xlu0 %2202
      %2204 = vrot.lane.b32.xlu0 %v1976, 80
      %v2205 = vpop.permute.xlu0 %2204
      %2206 = vrot.lane.b32.xlu0 %v1977, 80
      %v2207 = vpop.permute.xlu0 %2206
      %2208 = vrot.lane.b32.xlu0 %v1978, 80
      %v2209 = vpop.permute.xlu0 %2208
      %2210 = vrot.lane.b32.xlu0 %v1979, 80
      %v2211 = vpop.permute.xlu0 %2210
      %2212 = vrot.lane.b32.xlu0 %v1980, 80
      %v2213 = vpop.permute.xlu0 %2212
      %2214 = vrot.lane.b32.xlu0 %v1981, 80
      %v2215 = vpop.permute.xlu0 %2214
      %2216 = vrot.lane.b32.xlu0 %v1982, 80
      %v2217 = vpop.permute.xlu0 %2216
      %2218 = vrot.lane.b32.xlu0 %v1983, 80
      %v2219 = vpop.permute.xlu0 %2218
      %2220 = vrot.lane.b32.xlu0 %v1984, 80
      %v2221 = vpop.permute.xlu0 %2220
      %2222 = vrot.lane.b32.xlu0 %v1985, 80
      %v2223 = vpop.permute.xlu0 %2222
      %2224 = vrot.lane.b32.xlu0 %v1986, 80
      %v2225 = vpop.permute.xlu0 %2224
      %2226 = vrot.lane.b32.xlu0 %v1987, 80
      %v2227 = vpop.permute.xlu0 %2226
      %v2230 = vsel %vm327, %v1811, %v2005
      %v2233 = vsel %vm327, %v1812, %v2007
      %v2236 = vsel %vm327, %v1813, %v2009
      %v2239 = vsel %vm327, %v1814, %v2011
      %v2242 = vsel %vm327, %v1815, %v2013
      %v2245 = vsel %vm327, %v1816, %v2015
      %v2248 = vsel %vm327, %v1817, %v2017
      %v2251 = vsel %vm327, %v1818, %v2019
      %v2254 = vsel %vm327, %v1819, %v2021
      %v2257 = vsel %vm327, %v1820, %v2023
      %v2260 = vsel %vm327, %v1821, %v2025
      %v2263 = vsel %vm327, %v1822, %v2027
      %v2266 = vsel %vm327, %v1823, %v2029
      %v2269 = vsel %vm327, %v1824, %v2031
      %v2272 = vsel %vm327, %v1825, %v2033
      %v2275 = vsel %vm327, %v1826, %v2035
      %v2277 = vsel %vm1285, %v2230, %v2053
      %v2279 = vsel %vm1285, %v2233, %v2055
      %v2281 = vsel %vm1285, %v2236, %v2057
      %v2283 = vsel %vm1285, %v2239, %v2059
      %v2285 = vsel %vm1285, %v2242, %v2061
      %v2287 = vsel %vm1285, %v2245, %v2063
      %v2289 = vsel %vm1285, %v2248, %v2065
      %v2291 = vsel %vm1285, %v2251, %v2067
      %v2293 = vsel %vm1285, %v2254, %v2069
      %v2295 = vsel %vm1285, %v2257, %v2071
      %v2297 = vsel %vm1285, %v2260, %v2073
      %v2299 = vsel %vm1285, %v2263, %v2075
      %v2301 = vsel %vm1285, %v2266, %v2077
      %v2303 = vsel %vm1285, %v2269, %v2079
      %v2305 = vsel %vm1285, %v2272, %v2081
      %v2307 = vsel %vm1285, %v2275, %v2083
      %v2309 = vsel %vm1318, %v2277, %v2101
      %v2311 = vsel %vm1318, %v2279, %v2103
      %v2313 = vsel %vm1318, %v2281, %v2105
      %v2315 = vsel %vm1318, %v2283, %v2107
      %v2317 = vsel %vm1318, %v2285, %v2109
      %v2319 = vsel %vm1318, %v2287, %v2111
      %v2321 = vsel %vm1318, %v2289, %v2113
      %v2323 = vsel %vm1318, %v2291, %v2115
      %v2325 = vsel %vm1318, %v2293, %v2117
      %v2327 = vsel %vm1318, %v2295, %v2119
      %v2329 = vsel %vm1318, %v2297, %v2121
      %v2331 = vsel %vm1318, %v2299, %v2123
      %v2333 = vsel %vm1318, %v2301, %v2125
      %v2335 = vsel %vm1318, %v2303, %v2127
      %v2337 = vsel %vm1318, %v2305, %v2129
      %v2339 = vsel %vm1318, %v2307, %v2131
      %v2341 = vsel %vm1351, %v2309, %v2149
      %v2343 = vsel %vm1351, %v2311, %v2151
      %v2345 = vsel %vm1351, %v2313, %v2153
      %v2347 = vsel %vm1351, %v2315, %v2155
      %v2349 = vsel %vm1351, %v2317, %v2157
      %v2351 = vsel %vm1351, %v2319, %v2159
      %v2353 = vsel %vm1351, %v2321, %v2161
      %v2355 = vsel %vm1351, %v2323, %v2163
      %v2357 = vsel %vm1351, %v2325, %v2165
      %v2359 = vsel %vm1351, %v2327, %v2167
      %v2361 = vsel %vm1351, %v2329, %v2169
      %v2363 = vsel %vm1351, %v2331, %v2171
      %v2365 = vsel %vm1351, %v2333, %v2173
      %v2367 = vsel %vm1351, %v2335, %v2175
      %v2369 = vsel %vm1351, %v2337, %v2177
      %v2371 = vsel %vm1351, %v2339, %v2179
      %v2373 = vsel %vm1384, %v2341, %v2197
      %v2375 = vsel %vm1384, %v2343, %v2199
      %v2377 = vsel %vm1384, %v2345, %v2201
      %v2379 = vsel %vm1384, %v2347, %v2203
      %v2381 = vsel %vm1384, %v2349, %v2205
      %v2383 = vsel %vm1384, %v2351, %v2207
      %v2385 = vsel %vm1384, %v2353, %v2209
      %v2387 = vsel %vm1384, %v2355, %v2211
      %v2389 = vsel %vm1384, %v2357, %v2213
      %v2391 = vsel %vm1384, %v2359, %v2215
      %v2393 = vsel %vm1384, %v2361, %v2217
      %v2395 = vsel %vm1384, %v2363, %v2219
      %v2397 = vsel %vm1384, %v2365, %v2221
      %v2399 = vsel %vm1384, %v2367, %v2223
      %v2401 = vsel %vm1384, %v2369, %v2225
      %v2403 = vsel %vm1384, %v2371, %v2227
      %v2404 = vld [vmem:[%s6] sm:$0xf]
      %v2405 = vld [vmem:[%s6 + $0x4] sm:$0xf]
      %v2406 = vld [vmem:[%s6 + $0x8] sm:$0xf]
      %v2407 = vld [vmem:[%s6 + $0xc] sm:$0xf]
      %v2408 = vld [vmem:[%s6 + $0x10] sm:$0xf]
      %v2409 = vld [vmem:[%s6 + $0x14] sm:$0xf]
      %v2410 = vld [vmem:[%s6 + $0x18] sm:$0xf]
      %v2411 = vld [vmem:[%s6 + $0x1c] sm:$0xf]
      %v2412 = vld [vmem:[%s6 + $0x20] sm:$0xf]
      %v2413 = vld [vmem:[%s6 + $0x24] sm:$0xf]
      %v2414 = vld [vmem:[%s6 + $0x28] sm:$0xf]
      %v2415 = vld [vmem:[%s6 + $0x2c] sm:$0xf]
      %v2416 = vld [vmem:[%s7] sm:$0x1]
      %v2418 = vlaneseq
      %v2419 = vshrl.u32 %v2418, 7
      %v2420 = vsub.s32 0, %v2419
      %v2421 = vrot.slane %v2416, %v2420
      %v2439 = vunpack.c.l.b16 %v2373
      %v2440 = vunpack.c.l.b16 %v2375
      %v2441 = vunpack.c.l.b16 %v2377
      %v2442 = vunpack.c.l.b16 %v2379
      %v2443 = vunpack.c.l.b16 %v2381
      %v2444 = vunpack.c.l.b16 %v2383
      %v2445 = vunpack.c.l.b16 %v2385
      %v2446 = vunpack.c.l.b16 %v2387
      %v2447 = vunpack.c.l.b16 %v2389
      %v2448 = vunpack.c.l.b16 %v2391
      %v2449 = vunpack.c.l.b16 %v2393
      %v2450 = vunpack.c.l.b16 %v2395
      %v2451 = vunpack.c.l.b16 %v2397
      %v2452 = vunpack.c.l.b16 %v2399
      %v2453 = vunpack.c.l.b16 %v2401
      %v2454 = vunpack.c.l.b16 %v2403
      %v2455 = vpack.c.b16 %v2440, %v2439
      %v2456 = vpack.c.b16 %v2442, %v2441
      %v2457 = vpack.c.b16 %v2444, %v2443
      %v2458 = vpack.c.b16 %v2446, %v2445
      %v2459 = vpack.c.b16 %v2448, %v2447
      %v2460 = vpack.c.b16 %v2450, %v2449
      %v2461 = vpack.c.b16 %v2452, %v2451
      %v2462 = vpack.c.b16 %v2454, %v2453
      %v2475 = vunpack.c.l.b16 %v2404
      %v2476 = vunpack.c.l.b16 %v2405
      %v2477 = vunpack.c.l.b16 %v2406
      %v2478 = vunpack.c.l.b16 %v2407
      %v2479 = vunpack.c.l.b16 %v2408
      %v2480 = vunpack.c.l.b16 %v2409
      %v2481 = vunpack.c.l.b16 %v2410
      %v2482 = vunpack.c.l.b16 %v2411
      %v2483 = vunpack.c.l.b16 %v2412
      %v2484 = vunpack.c.l.b16 %v2413
      %v2485 = vunpack.c.l.b16 %v2414
      %v2486 = vunpack.c.l.b16 %v2415
      %v2487 = vpack.c.b16 %v2476, %v2475
      %v2488 = vpack.c.b16 %v2478, %v2477
      %v2489 = vpack.c.b16 %v2480, %v2479
      %v2490 = vpack.c.b16 %v2482, %v2481
      %v2491 = vpack.c.b16 %v2484, %v2483
      %v2492 = vpack.c.b16 %v2486, %v2485
      %v2500 = vsel %vm1512, %v2455, 0
      %v2503 = vsel %vm1512, %v2456, 0
      %v2506 = vsel %vm1512, %v2457, 0
      %v2509 = vsel %vm1512, %v2458, 0
      %v2512 = vsel %vm1512, %v2459, 0
      %v2515 = vsel %vm1512, %v2460, 0
      %v2518 = vsel %vm1512, %v2461, 0
      %v2521 = vsel %vm1512, %v2462, 0
      %2523 = vmatprep.subr.bf16.mxu0 0
      %2524 = vmatpush1.bf16.msra.mxu0 %v2487
      %2525 = vmatprep.subr.bf16.mxu0 0
      %2526 = vmatpush1.bf16.msra.mxu0 %v2488
      %2527 = vmatprep.subr.bf16.mxu0 0
      %2528 = vmatpush1.bf16.msra.mxu0 %v2489
      %2529 = vmatprep.subr.bf16.mxu0 0
      %2530 = vmatpush1.bf16.msra.mxu0 %v2490
      %2531 = vmatprep.subr.bf16.mxu0 0
      %2532 = vmatpush1.bf16.msra.mxu0 %v2491
      %2533 = vmatprep.subr.bf16.mxu0 0
      %2534 = vmatpush1.bf16.msra.mxu0 %v2492
      %2535 = vmatprep.subr.bf16.mxu0 0
      %2536 = vmatpush1.bf16.msra.mxu0 0
      %2537 = vmatprep.subr.bf16.mxu0 0
      %2538 = vmatpush1.bf16.msra.mxu0 0
      %2539 = vmatprep.subr.bf16.mxu0 0
      %2540 = vmatpush1.bf16.msra.mxu0 0
      %2541 = vmatprep.subr.bf16.mxu0 0
      %2542 = vmatpush1.bf16.msra.mxu0 0
      %2543 = vmatprep.subr.bf16.mxu0 0
      %2544 = vmatpush1.bf16.msra.mxu0 0
      %2545 = vmatprep.subr.bf16.mxu0 0
      %2546 = vmatpush1.bf16.msra.mxu0 0
      %2547 = vmatprep.subr.bf16.mxu0 0
      %2548 = vmatpush1.bf16.msra.mxu0 0
      %2549 = vmatprep.subr.bf16.mxu0 0
      %2550 = vmatpush1.bf16.msra.mxu0 0
      %2551 = vmatprep.subr.bf16.mxu0 0
      %2552 = vmatpush1.bf16.msra.mxu0 0
      %2553 = vmatprep.subr.bf16.mxu0 0
      %2554 = vmatpush1.bf16.msra.mxu0 0
      %2555 = vmatprep.mubr.bf16.mxu0 0
      %2556 = vmatmul.mubr.bf16.gmra.mrb[0].mxu0 %v2500
      %v2557 = vpop.f32.mrb[0].mxu0
      %v2558 = vadd.f32 %v2421, %v2557
      %v2559 = vpop.f32.mrb[0].mxu0
      %v2560 = vpop.f32.mrb[0].mxu0
      %v2561 = vadd.f32 %v2421, %v2560
      %v2562 = vpop.f32.mrb[0].mxu0
      %2563 = vmatprep.mubr.bf16.mxu0 0
      %2564 = vmatmul.mubr.bf16.gmra.mrb[0].mxu0 %v2503
      %v2565 = vpop.f32.mrb[0].mxu0
      %v2566 = vadd.f32 %v2421, %v2565
      %v2567 = vpop.f32.mrb[0].mxu0
      %v2568 = vpop.f32.mrb[0].mxu0
      %v2569 = vadd.f32 %v2421, %v2568
      %v2570 = vpop.f32.mrb[0].mxu0
      %2571 = vmatprep.mubr.bf16.mxu0 0
      %2572 = vmatmul.mubr.bf16.gmra.mrb[0].mxu0 %v2506
      %v2573 = vpop.f32.mrb[0].mxu0
      %v2574 = vadd.f32 %v2421, %v2573
      %v2575 = vpop.f32.mrb[0].mxu0
      %v2576 = vpop.f32.mrb[0].mxu0
      %v2577 = vadd.f32 %v2421, %v2576
      %v2578 = vpop.f32.mrb[0].mxu0
      %2579 = vmatprep.mubr.bf16.mxu0 0
      %2580 = vmatmul.mubr.bf16.gmra.mrb[0].mxu0 %v2509
      %v2581 = vpop.f32.mrb[0].mxu0
      %v2582 = vadd.f32 %v2421, %v2581
      %v2583 = vpop.f32.mrb[0].mxu0
      %v2584 = vpop.f32.mrb[0].mxu0
      %v2585 = vadd.f32 %v2421, %v2584
      %v2586 = vpop.f32.mrb[0].mxu0
      %2587 = vmatprep.mubr.bf16.mxu0 0
      %2588 = vmatmul.mubr.bf16.gmra.mrb[0].mxu0 %v2512
      %v2589 = vpop.f32.mrb[0].mxu0
      %v2590 = vadd.f32 %v2421, %v2589
      %v2591 = vpop.f32.mrb[0].mxu0
      %v2592 = vpop.f32.mrb[0].mxu0
      %v2593 = vadd.f32 %v2421, %v2592
      %v2594 = vpop.f32.mrb[0].mxu0
      %2595 = vmatprep.mubr.bf16.mxu0 0
      %2596 = vmatmul.mubr.bf16.gmra.mrb[0].mxu0 %v2515
      %v2597 = vpop.f32.mrb[0].mxu0
      %v2598 = vadd.f32 %v2421, %v2597
      %v2599 = vpop.f32.mrb[0].mxu0
      %v2600 = vpop.f32.mrb[0].mxu0
      %v2601 = vadd.f32 %v2421, %v2600
      %v2602 = vpop.f32.mrb[0].mxu0
      %2603 = vmatprep.mubr.bf16.mxu0 0
      %2604 = vmatmul.mubr.bf16.gmra.mrb[0].mxu0 %v2518
      %v2605 = vpop.f32.mrb[0].mxu0
      %v2606 = vadd.f32 %v2421, %v2605
      %v2607 = vpop.f32.mrb[0].mxu0
      %v2608 = vpop.f32.mrb[0].mxu0
      %v2609 = vadd.f32 %v2421, %v2608
      %v2610 = vpop.f32.mrb[0].mxu0
      %2611 = vmatprep.mubr.bf16.mxu0 0
      %2612 = vmatmul.mubr.bf16.gmra.mrb[0].mxu0 %v2521
      %v2613 = vpop.f32.mrb[0].mxu0
      %v2614 = vadd.f32 %v2421, %v2613
      %v2615 = vpop.f32.mrb[0].mxu0
      %v2616 = vpop.f32.mrb[0].mxu0
      %v2617 = vadd.f32 %v2421, %v2616
      %v2618 = vpop.f32.mrb[0].mxu0
      %2619 = vdwg.mxu0
      %v2620 = vmax.f32 %v2558, 0.0
      %v2621 = vmax.f32 %v2561, 0.0
      %v2622 = vmax.f32 %v2566, 0.0
      %v2623 = vmax.f32 %v2569, 0.0
      %v2624 = vmax.f32 %v2574, 0.0
      %v2625 = vmax.f32 %v2577, 0.0
      %v2626 = vmax.f32 %v2582, 0.0
      %v2627 = vmax.f32 %v2585, 0.0
      %v2628 = vmax.f32 %v2590, 0.0
      %v2629 = vmax.f32 %v2593, 0.0
      %v2630 = vmax.f32 %v2598, 0.0
      %v2631 = vmax.f32 %v2601, 0.0
      %v2632 = vmax.f32 %v2606, 0.0
      %v2633 = vmax.f32 %v2609, 0.0
      %v2634 = vmax.f32 %v2614, 0.0
      %v2635 = vmax.f32 %v2617, 0.0
      %v2636 = vld [vmem:[%s706] sm:$0xff]
      %v2637 = vld [vmem:[%s706 + $0x10] sm:$0xff]
      %v2638 = vld [vmem:[%s706 + $0x20] sm:$0xff]
      %v2639 = vld [vmem:[%s706 + $0x30] sm:$0xff]
      %v2640 = vld [vmem:[%s706 + $0x40] sm:$0xff]
      %v2641 = vld [vmem:[%s706 + $0x50] sm:$0xff]
      %v2642 = vld [vmem:[%s706 + $0x60] sm:$0xff]
      %v2643 = vld [vmem:[%s706 + $0x70] sm:$0xff]
      %v2644 = vld [vmem:[%s706 + $0x80] sm:$0xff]
      %v2645 = vld [vmem:[%s706 + $0x90] sm:$0xff]
      %v2646 = vld [vmem:[%s706 + $0xa0] sm:$0xff]
      %v2647 = vld [vmem:[%s706 + $0xb0] sm:$0xff]
      %v2648 = vld [vmem:[%s706 + $0xc0] sm:$0xff]
      %v2649 = vld [vmem:[%s706 + $0xd0] sm:$0xff]
      %v2650 = vld [vmem:[%s706 + $0xe0] sm:$0xff]
      %v2651 = vld [vmem:[%s706 + $0xf0] sm:$0xff]
      %v2652 = vld [vmem:[%s706 + $0x1] sm:$0xff]
      %v2653 = vld [vmem:[%s706 + $0x11] sm:$0xff]
      %v2654 = vld [vmem:[%s706 + $0x21] sm:$0xff]
      %v2655 = vld [vmem:[%s706 + $0x31] sm:$0xff]
      %v2656 = vld [vmem:[%s706 + $0x41] sm:$0xff]
      %v2657 = vld [vmem:[%s706 + $0x51] sm:$0xff]
      %v2658 = vld [vmem:[%s706 + $0x61] sm:$0xff]
      %v2659 = vld [vmem:[%s706 + $0x71] sm:$0xff]
      %v2660 = vld [vmem:[%s706 + $0x81] sm:$0xff]
      %v2661 = vld [vmem:[%s706 + $0x91] sm:$0xff]
      %v2662 = vld [vmem:[%s706 + $0xa1] sm:$0xff]
      %v2663 = vld [vmem:[%s706 + $0xb1] sm:$0xff]
      %v2664 = vld [vmem:[%s706 + $0xc1] sm:$0xff]
      %v2665 = vld [vmem:[%s706 + $0xd1] sm:$0xff]
      %v2666 = vld [vmem:[%s706 + $0xe1] sm:$0xff]
      %v2667 = vld [vmem:[%s706 + $0xf1] sm:$0xff]
      %2684 = vrot.lane.b32.xlu0 %v2636, 120
      %v2685 = vpop.permute.xlu0 %2684
      %2686 = vrot.lane.b32.xlu0 %v2637, 120
      %v2687 = vpop.permute.xlu0 %2686
      %2688 = vrot.lane.b32.xlu0 %v2638, 120
      %v2689 = vpop.permute.xlu0 %2688
      %2690 = vrot.lane.b32.xlu0 %v2639, 120
      %v2691 = vpop.permute.xlu0 %2690
      %2692 = vrot.lane.b32.xlu0 %v2640, 120
      %v2693 = vpop.permute.xlu0 %2692
      %2694 = vrot.lane.b32.xlu0 %v2641, 120
      %v2695 = vpop.permute.xlu0 %2694
      %2696 = vrot.lane.b32.xlu0 %v2642, 120
      %v2697 = vpop.permute.xlu0 %2696
      %2698 = vrot.lane.b32.xlu0 %v2643, 120
      %v2699 = vpop.permute.xlu0 %2698
      %2700 = vrot.lane.b32.xlu0 %v2644, 120
      %v2701 = vpop.permute.xlu0 %2700
      %2702 = vrot.lane.b32.xlu0 %v2645, 120
      %v2703 = vpop.permute.xlu0 %2702
      %2704 = vrot.lane.b32.xlu0 %v2646, 120
      %v2705 = vpop.permute.xlu0 %2704
      %2706 = vrot.lane.b32.xlu0 %v2647, 120
      %v2707 = vpop.permute.xlu0 %2706
      %2708 = vrot.lane.b32.xlu0 %v2648, 120
      %v2709 = vpop.permute.xlu0 %2708
      %2710 = vrot.lane.b32.xlu0 %v2649, 120
      %v2711 = vpop.permute.xlu0 %2710
      %2712 = vrot.lane.b32.xlu0 %v2650, 120
      %v2713 = vpop.permute.xlu0 %2712
      %2714 = vrot.lane.b32.xlu0 %v2651, 120
      %v2715 = vpop.permute.xlu0 %2714
      %2748 = vrot.lane.b32.xlu0 %v2652, 4
      %v2749 = vpop.permute.xlu0 %2748
      %2750 = vrot.lane.b32.xlu0 %v2653, 4
      %v2751 = vpop.permute.xlu0 %2750
      %2752 = vrot.lane.b32.xlu0 %v2654, 4
      %v2753 = vpop.permute.xlu0 %2752
      %2754 = vrot.lane.b32.xlu0 %v2655, 4
      %v2755 = vpop.permute.xlu0 %2754
      %2756 = vrot.lane.b32.xlu0 %v2656, 4
      %v2757 = vpop.permute.xlu0 %2756
      %2758 = vrot.lane.b32.xlu0 %v2657, 4
      %v2759 = vpop.permute.xlu0 %2758
      %2760 = vrot.lane.b32.xlu0 %v2658, 4
      %v2761 = vpop.permute.xlu0 %2760
      %2762 = vrot.lane.b32.xlu0 %v2659, 4
      %v2763 = vpop.permute.xlu0 %2762
      %2764 = vrot.lane.b32.xlu0 %v2660, 4
      %v2765 = vpop.permute.xlu0 %2764
      %2766 = vrot.lane.b32.xlu0 %v2661, 4
      %v2767 = vpop.permute.xlu0 %2766
      %2768 = vrot.lane.b32.xlu0 %v2662, 4
      %v2769 = vpop.permute.xlu0 %2768
      %2770 = vrot.lane.b32.xlu0 %v2663, 4
      %v2771 = vpop.permute.xlu0 %2770
      %2772 = vrot.lane.b32.xlu0 %v2664, 4
      %v2773 = vpop.permute.xlu0 %2772
      %2774 = vrot.lane.b32.xlu0 %v2665, 4
      %v2775 = vpop.permute.xlu0 %2774
      %2776 = vrot.lane.b32.xlu0 %v2666, 4
      %v2777 = vpop.permute.xlu0 %2776
      %2778 = vrot.lane.b32.xlu0 %v2667, 4
      %v2779 = vpop.permute.xlu0 %2778
      %v2796 = vsel %vm625, %v2685, %v2749
      %v2797 = vsel %vm625, %v2687, %v2751
      %v2798 = vsel %vm625, %v2689, %v2753
      %v2799 = vsel %vm625, %v2691, %v2755
      %v2800 = vsel %vm625, %v2693, %v2757
      %v2801 = vsel %vm625, %v2695, %v2759
      %v2802 = vsel %vm625, %v2697, %v2761
      %v2803 = vsel %vm625, %v2699, %v2763
      %v2804 = vsel %vm625, %v2701, %v2765
      %v2805 = vsel %vm625, %v2703, %v2767
      %v2806 = vsel %vm625, %v2705, %v2769
      %v2807 = vsel %vm625, %v2707, %v2771
      %v2808 = vsel %vm625, %v2709, %v2773
      %v2809 = vsel %vm625, %v2711, %v2775
      %v2810 = vsel %vm625, %v2713, %v2777
      %v2811 = vsel %vm625, %v2715, %v2779
      %v2812 = vadd.f32 %v2620, %v2796
      %v2813 = vadd.f32 %v2621, %v2797
      %v2814 = vadd.f32 %v2622, %v2798
      %v2815 = vadd.f32 %v2623, %v2799
      %v2816 = vadd.f32 %v2624, %v2800
      %v2817 = vadd.f32 %v2625, %v2801
      %v2818 = vadd.f32 %v2626, %v2802
      %v2819 = vadd.f32 %v2627, %v2803
      %v2820 = vadd.f32 %v2628, %v2804
      %v2821 = vadd.f32 %v2629, %v2805
      %v2822 = vadd.f32 %v2630, %v2806
      %v2823 = vadd.f32 %v2631, %v2807
      %v2824 = vadd.f32 %v2632, %v2808
      %v2825 = vadd.f32 %v2633, %v2809
      %v2826 = vadd.f32 %v2634, %v2810
      %v2827 = vadd.f32 %v2635, %v2811
      %2828 = vst.msk [vmem:[%s325] sm:$0xff] %vm431, %v2812
      %2829 = vst.msk [vmem:[%s325 + $0x8] sm:$0xff] %vm431, %v2813
      %2830 = vst.msk [vmem:[%s325 + $0x10] sm:$0xff] %vm431, %v2814
      %2831 = vst.msk [vmem:[%s325 + $0x18] sm:$0xff] %vm431, %v2815
      %2832 = vst.msk [vmem:[%s325 + $0x20] sm:$0xff] %vm431, %v2816
      %2833 = vst.msk [vmem:[%s325 + $0x28] sm:$0xff] %vm431, %v2817
      %2834 = vst.msk [vmem:[%s325 + $0x30] sm:$0xff] %vm431, %v2818
      %2835 = vst.msk [vmem:[%s325 + $0x38] sm:$0xff] %vm431, %v2819
      %2836 = vst.msk [vmem:[%s325 + $0x40] sm:$0xff] %vm431, %v2820
      %2837 = vst.msk [vmem:[%s325 + $0x48] sm:$0xff] %vm431, %v2821
      %2838 = vst.msk [vmem:[%s325 + $0x50] sm:$0xff] %vm431, %v2822
      %2839 = vst.msk [vmem:[%s325 + $0x58] sm:$0xff] %vm431, %v2823
      %2840 = vst.msk [vmem:[%s325 + $0x60] sm:$0xff] %vm431, %v2824
      %2841 = vst.msk [vmem:[%s325 + $0x68] sm:$0xff] %vm431, %v2825
      %2842 = vst.msk [vmem:[%s325 + $0x70] sm:$0xff] %vm431, %v2826
      %2843 = vst.msk [vmem:[%s325 + $0x78] sm:$0xff] %vm431, %v2827
      %p2844 = scmp.lt.s32.totalorder %s19, 1
      %s2845 = scalar_select %p2844, %s19, 1
      %s2846 = smul.addr %s2845, 16
      %s2847 = smul.addr %s2846, 8
      %s2848 = scalar_lea.vmem %s8, %s2847
      // Predicated region
      $region53: #{tpu_custom_call.1} parent=51 // pred_check
        %p2849 = pneg %p215
      $region54: #{tpu_custom_call.1} parent=51 // pred_check_branch
        %2851 = sbr.rel (%p2849) target = $region56
      $region55: #{tpu_custom_call.1} parent=51 // pred_region
        _
      $region56: #{tpu_custom_call.1} parent=51 // pred_fallthru
        _
    $region52: #{tpu_custom_call.1} parent=5 // pred_fallthru
      _
    %p2852 = scmp.le.s32.totalorder 2, %s14
    // Predicated region
    $region57: #{tpu_custom_call.1} parent=5 // pred_check
      %p2853 = pneg %p2852
    $region58: #{tpu_custom_call.1} parent=5 // pred_check_branch
      %2855 = sbr.rel (%p2853) target = $region60
    $region59: #{tpu_custom_call.1} parent=5 // pred_region
      %s2856 = ssub.s32 %s14, 2
      // Predicated region
      $region61: #{tpu_custom_call.1} parent=59 // pred_check
        %p2857 = pneg %p221
      $region62: #{tpu_custom_call.1} parent=59 // pred_check_branch
        %2859 = sbr.rel (%p2857) target = $region64
      $region63: #{tpu_custom_call.1} parent=59 // pred_region
        %p2860 = scmp.lt.s32.totalorder %s20, 1
        %s2861 = scalar_select %p2860, %s20, 1
        %s2862 = smul.addr %s2861, 16
        %s2863 = smul.addr %s2862, 8
        %s2864 = scalar_lea.vmem %s8, %s2863
      $region64: #{tpu_custom_call.1} parent=59 // pred_fallthru
        _
    $region60: #{tpu_custom_call.1} parent=5 // pred_fallthru
      _
  $region6: #{tpu_custom_call.1} parent=0 // loop_footer
    %s18 = sadd.s32 1, %s14
  $region7: #{tpu_custom_call.1} parent=0 // loop_footer_branch
    %13 = sbr.rel target = $region3
  $region8: #{tpu_custom_call.1} parent=0 // loop_exit
    _

</llo_original>
